<compile_context>
chip_gen: v5e
topology: v5e:2x2
jax: 0.10.0
libtpu: 0.0.40
codegen_flags: <defaults>
</compile_context>

<pallas_src>
import jax
import jax.numpy as jnp
from jax import lax
from jax.experimental import pallas as pl
from jax.experimental.pallas import tpu as pltpu  # noqa: F401  (kept for parity / future scratch use)


# ----------------------------------------------------------------------------
# Fused kernel: L LSTM layers + Linear -> tanh -> Linear head.
# Everything is traced values (vregs / compiler-managed VMEM); no scratch refs.
# ----------------------------------------------------------------------------
def make_fused_kernel(L, T, B, H, D_in, P):
    def kernel(*refs):
        idx = 0
        x_ref = refs[idx]; idx += 1                              # (B, T*D_in)
        lstm_w = []
        for _ in range(L):
            lstm_w.append((refs[idx], refs[idx + 1], refs[idx + 2]))
            idx += 3                                             # wihT, whhT, bias(1,4H)
        h0_ref = refs[idx]; c0_ref = refs[idx + 1]; idx += 2     # (L, B, H) each
        w1_ref, b1_ref, w2_ref, b2_ref = refs[idx:idx + 4]; idx += 4
        out_ref, hN_ref, cN_ref = refs[idx:idx + 3]

        ys = None  # per-step outputs of the previous layer (list of (B, H))
        for layer in range(L):
            wihT_ref, whhT_ref, b_ref = lstm_w[layer]
            wih = wihT_ref[...]                                  # (D_l, 4H), loop-invariant
            whh = whhT_ref[...]                                  # (H, 4H),  loop-invariant
            bias = b_ref[...]                                    # (1, 4H)

            # h / c live in vregs (loop-carried Python values), never in VMEM.
            h = h0_ref[layer]                                    # (B, H)
            c = c0_ref[layer]                                    # (B, H)

            new_ys = []
            for t in range(T):
                if layer == 0:
                    # static lane-slice of the (B, T*D_in) input slab
                    x_t = x_ref[:, t * D_in:(t + 1) * D_in]      # (B, D_in)
                else:
                    x_t = ys[t]                                  # (B, H) from prev layer

                # Input projection: independent of h -> schedulable off the
                # serial chain (this is what lets layers wavefront).
                zx = jnp.dot(x_t, wih, preferred_element_type=jnp.float32) + bias
                # Recurrent projection: the only serial dependence.
                z = zx + jnp.dot(h, whh, preferred_element_type=jnp.float32)

                # Full-vreg activations: one sigmoid push + one tanh push on
                # the whole (B, 4H) vreg, then extract the 4 gate blocks.
                s = jax.nn.sigmoid(z)                            # i | f | . | o
                u = jnp.tanh(z)                                  # . | . | g | .
                i_g = s[:, 0 * H:1 * H]
                f_g = s[:, 1 * H:2 * H]
                g_g = u[:, 2 * H:3 * H]
                o_g = s[:, 3 * H:4 * H]

                c = f_g * c + i_g * g_g
                h = o_g * jnp.tanh(c)
                new_ys.append(h)

            ys = new_ys
            # Final states written once per layer (no per-step stores).
            hN_ref[layer] = h
            cN_ref[layer] = c

        # --- FC head: Linear(H,H) -> tanh -> Linear(H, P) --------------------
        # Applied per time step; each store is a 128-lane-aligned, unmasked
        # slab of the batch-major (B, T*P) output (no transpose anywhere).
        w1 = w1_ref[...]; b1 = b1_ref[...]
        w2 = w2_ref[...]; b2 = b2_ref[...]
        for t in range(T):
            hdn = jnp.tanh(
                jnp.dot(ys[t], w1, preferred_element_type=jnp.float32) + b1)
            out_t = jnp.dot(hdn, w2, preferred_element_type=jnp.float32) + b2
            out_ref[:, t * P:(t + 1) * P] = out_t

    return kernel


# ----------------------------------------------------------------------------
# Parameter init (deterministic, PyTorch-style U(-1/sqrt(H), 1/sqrt(H)))
# ----------------------------------------------------------------------------
def init_params(key, input_dim, hidden_dim, num_layers, output_dim):
    k = 1.0 / jnp.sqrt(jnp.float32(hidden_dim))
    out_pad = ((output_dim + 127) // 128) * 128               # lane-dense head output
    params = {"hidden_dim": hidden_dim, "num_layers": num_layers,
              "output_dim": output_dim, "out_pad": out_pad,
              "input_dim": input_dim, "lstm": [], "fc": None}
    for layer in range(num_layers):
        d_in = input_dim if layer == 0 else hidden_dim
        key, k1, k2, k3, k4 = jax.random.split(key, 5)
        w_ih = jax.random.uniform(k1, (4 * hidden_dim, d_in), jnp.float32, -k, k)
        w_hh = jax.random.uniform(k2, (4 * hidden_dim, hidden_dim), jnp.float32, -k, k)
        b_ih = jax.random.uniform(k3, (4 * hidden_dim,), jnp.float32, -k, k)
        b_hh = jax.random.uniform(k4, (4 * hidden_dim,), jnp.float32, -k, k)
        params["lstm"].append(
            (w_ih.T, w_hh.T, (b_ih + b_hh).reshape(1, 4 * hidden_dim)))
    key, k1, k2, k3, k4 = jax.random.split(key, 5)
    kf = 1.0 / jnp.sqrt(jnp.float32(hidden_dim))
    w1 = jax.random.uniform(k1, (hidden_dim, hidden_dim), jnp.float32, -kf, kf)
    b1 = jax.random.uniform(k2, (hidden_dim,), jnp.float32, -kf, kf)
    w2 = jax.random.uniform(k3, (output_dim, hidden_dim), jnp.float32, -kf, kf)
    b2 = jax.random.uniform(k4, (output_dim,), jnp.float32, -kf, kf)
    # zero-pad the last Linear to a 128-wide lane-dense output slab
    w2T_pad = jnp.zeros((hidden_dim, out_pad), jnp.float32).at[:, :output_dim].set(w2.T)
    b2_pad = jnp.zeros((1, out_pad), jnp.float32).at[:, :output_dim].set(b2.reshape(1, -1))
    params["fc"] = (w1.T, b1.reshape(1, -1), w2T_pad, b2_pad)
    return params


# ----------------------------------------------------------------------------
# Full forward pass, matching PINN_LSTM.forward semantics.
# ----------------------------------------------------------------------------
def pinn_lstm_forward(params, x_seq, hidden=None):
    """x_seq: (B, T, input_dim). Returns (out (B,T,output_dim), (h_n, c_n))."""
    B, T, D_in = x_seq.shape
    H = params["hidden_dim"]
    L = params["num_layers"]
    out_dim = params["output_dim"]
    P = params["out_pad"]
    if hidden is None:
        h0 = jnp.zeros((L, B, H), jnp.float32)
        c0 = jnp.zeros((L, B, H), jnp.float32)
    else:
        h0, c0 = hidden
        h0 = jnp.asarray(h0, jnp.float32)
        c0 = jnp.asarray(c0, jnp.float32)

    # pure reshape (no transpose, no extra XLA copy kernel): row b holds
    # [x(b,0,:) | x(b,1,:) | ... | x(b,T-1,:)]
    x_flat = x_seq.astype(jnp.float32).reshape(B, T * D_in)

    inputs = [x_flat]
    for layer in range(L):
        inputs.extend(params["lstm"][layer])
    inputs.extend([h0, c0])
    inputs.extend(params["fc"])

    kernel = make_fused_kernel(L, T, B, H, D_in, P)
    out_flat, h_n, c_n = pl.pallas_call(
        kernel,
        out_shape=[
            jax.ShapeDtypeStruct((B, T * P), jnp.float32),
            jax.ShapeDtypeStruct((L, B, H), jnp.float32),
            jax.ShapeDtypeStruct((L, B, H), jnp.float32),
        ],
    )(*inputs)

    out = out_flat.reshape(B, T, P)[..., :out_dim]   # reshape + slice only
    return out, (h_n, c_n)


# ----------------------------------------------------------------------------
# Pure-JAX reference (lax.scan) for a correctness check.
# ----------------------------------------------------------------------------
def pinn_lstm_reference(params, x_seq, hidden=None):
    B, T, _ = x_seq.shape
    H = params["hidden_dim"]
    L = params["num_layers"]
    out_dim = params["output_dim"]
    if hidden is None:
        h0 = jnp.zeros((L, B, H), jnp.float32)
        c0 = jnp.zeros((L, B, H), jnp.float32)
    else:
        h0, c0 = hidden
        h0 = jnp.asarray(h0, jnp.float32)
        c0 = jnp.asarray(c0, jnp.float32)
    x = jnp.transpose(x_seq.astype(jnp.float32), (1, 0, 2))  # (T, B, D)
    h_fin, c_fin = [], []
    for layer in range(L):
        wihT, whhT, b = params["lstm"][layer]

        def step(carry, x_t):
            h, c = carry
            z = x_t @ wihT + h @ whhT + b
            i = jax.nn.sigmoid(z[:, 0 * H:1 * H])
            f = jax.nn.sigmoid(z[:, 1 * H:2 * H])
            g = jnp.tanh(z[:, 2 * H:3 * H])
            o = jax.nn.sigmoid(z[:, 3 * H:4 * H])
            c = f * c + i * g
            h = o * jnp.tanh(c)
            return (h, c), h

        (hN, cN), y = lax.scan(step, (h0[layer], c0[layer]), x)
        x = y
        h_fin.append(hN)
        c_fin.append(cN)
    w1T, b1, w2T_pad, b2_pad = params["fc"]
    out = (jnp.tanh(x @ w1T + b1) @ w2T_pad + b2_pad)[..., :out_dim]
    return out.transpose(1, 0, 2), (jnp.stack(h_fin, 0), jnp.stack(c_fin, 0))


if __name__ == "__main__":
    input_dim, hidden_dim, num_layers, output_dim = 16, 32, 2, 4
    B, T = 8, 8

    key = jax.random.PRNGKey(0)
    pkey, xkey = jax.random.split(key)
    params = init_params(pkey, input_dim, hidden_dim, num_layers, output_dim)
    x_seq = jax.random.normal(xkey, (B, T, input_dim), jnp.float32)

    out, (h_n, c_n) = pinn_lstm_forward(params, x_seq)
    out = jax.block_until_ready(out)
    h_n = jax.block_until_ready(h_n)
    c_n = jax.block_until_ready(c_n)

    assert out.shape == (B, T, output_dim)
    assert h_n.shape == (num_layers, B, hidden_dim)
    assert c_n.shape == (num_layers, B, hidden_dim)

    ref_out, (ref_h, ref_c) = pinn_lstm_reference(params, x_seq)
    assert jnp.allclose(out, ref_out, atol=1e-4, rtol=1e-4)
    assert jnp.allclose(h_n, ref_h, atol=1e-4, rtol=1e-4)
    assert jnp.allclose(c_n, ref_c, atol=1e-4, rtol=1e-4)

    print("KERNEL_OK")
</pallas_src>

<mosaic_0001>
module attributes {stable_mosaic.version = 11 : i64} {
  func.func @kernel(%arg0: memref<8x128xf32, #tpu.memory_space<vmem>>, %arg1: memref<16x128xf32, #tpu.memory_space<vmem>>, %arg2: memref<32x128xf32, #tpu.memory_space<vmem>>, %arg3: memref<1x128xf32, #tpu.memory_space<vmem>>, %arg4: memref<32x128xf32, #tpu.memory_space<vmem>>, %arg5: memref<32x128xf32, #tpu.memory_space<vmem>>, %arg6: memref<1x128xf32, #tpu.memory_space<vmem>>, %arg7: memref<2x8x32xf32, #tpu.memory_space<vmem>>, %arg8: memref<2x8x32xf32, #tpu.memory_space<vmem>>, %arg9: memref<32x32xf32, #tpu.memory_space<vmem>>, %arg10: memref<1x32xf32, #tpu.memory_space<vmem>>, %arg11: memref<32x128xf32, #tpu.memory_space<vmem>>, %arg12: memref<1x128xf32, #tpu.memory_space<vmem>>, %arg13: memref<8x1024xf32, #tpu.memory_space<vmem>>, %arg14: memref<2x8x32xf32, #tpu.memory_space<vmem>>, %arg15: memref<2x8x32xf32, #tpu.memory_space<vmem>>) attributes {dimension_semantics = [], scalar_prefetch = 0 : i64, scratch_operands = 0 : i64, tpu.core_type = #tpu.core_type<tc>} {
    %c0 = arith.constant 0 : index
    %c0_0 = arith.constant 0 : index
    %0 = vector.load %arg1[%c0, %c0_0] : memref<16x128xf32, #tpu.memory_space<vmem>>, vector<16x128xf32>
    %c0_1 = arith.constant 0 : index
    %c0_2 = arith.constant 0 : index
    %1 = vector.load %arg2[%c0_1, %c0_2] : memref<32x128xf32, #tpu.memory_space<vmem>>, vector<32x128xf32>
    %c0_3 = arith.constant 0 : index
    %c0_4 = arith.constant 0 : index
    %2 = vector.load %arg3[%c0_3, %c0_4] : memref<1x128xf32, #tpu.memory_space<vmem>>, vector<1x128xf32>
    %c0_5 = arith.constant 0 : index
    %c0_6 = arith.constant 0 : index
    %c0_7 = arith.constant 0 : index
    %3 = vector.load %arg7[%c0_5, %c0_6, %c0_7] : memref<2x8x32xf32, #tpu.memory_space<vmem>>, vector<1x8x32xf32>
    %4 = vector.shape_cast %3 : vector<1x8x32xf32> to vector<8x32xf32>
    %c0_8 = arith.constant 0 : index
    %c0_9 = arith.constant 0 : index
    %c0_10 = arith.constant 0 : index
    %5 = vector.load %arg8[%c0_8, %c0_9, %c0_10] : memref<2x8x32xf32, #tpu.memory_space<vmem>>, vector<1x8x32xf32>
    %6 = vector.shape_cast %5 : vector<1x8x32xf32> to vector<8x32xf32>
    %c0_11 = arith.constant 0 : index
    %c0_12 = arith.constant 0 : index
    %7 = vector.load %arg0[%c0_11, %c0_12] : memref<8x128xf32, #tpu.memory_space<vmem>>, vector<8x16xf32>
    %cst = arith.constant dense<0.000000e+00> : vector<8x128xf32>
    %8 = tpu.matmul %7, %0, %cst {dimension_numbers = #tpu.dot_dimension_numbers<[1], [0], [0], [1], [0, 0, 1, 1], [], []>} : vector<8x16xf32>, vector<16x128xf32>, vector<8x128xf32> -> vector<8x128xf32>
    %9 = vector.broadcast %2 : vector<1x128xf32> to vector<8x128xf32>
    %10 = arith.addf %8, %9 : vector<8x128xf32>
    %cst_13 = arith.constant dense<0.000000e+00> : vector<8x128xf32>
    %11 = tpu.matmul %4, %1, %cst_13 {dimension_numbers = #tpu.dot_dimension_numbers<[1], [0], [0], [1], [0, 0, 1, 1], [], []>} : vector<8x32xf32>, vector<32x128xf32>, vector<8x128xf32> -> vector<8x128xf32>
    %12 = arith.addf %10, %11 : vector<8x128xf32>
    %13 = arith.negf %12 : vector<8x128xf32>
    %14 = math.exp %13 : vector<8x128xf32>
    %cst_14 = arith.constant 1.000000e+00 : f32
    %15 = vector.broadcast %cst_14 : f32 to vector<8x128xf32>
    %16 = arith.addf %15, %14 : vector<8x128xf32>
    %17 = arith.divf %15, %16 : vector<8x128xf32>
    %18 = math.tanh %12 : vector<8x128xf32>
    %19 = vector.extract_strided_slice %17 {offsets = [0, 0], sizes = [8, 32], strides = [1, 1]} : vector<8x128xf32> to vector<8x32xf32>
    %20 = vector.extract_strided_slice %17 {offsets = [0, 32], sizes = [8, 32], strides = [1, 1]} : vector<8x128xf32> to vector<8x32xf32>
    %21 = vector.extract_strided_slice %18 {offsets = [0, 64], sizes = [8, 32], strides = [1, 1]} : vector<8x128xf32> to vector<8x32xf32>
    %22 = vector.extract_strided_slice %17 {offsets = [0, 96], sizes = [8, 32], strides = [1, 1]} : vector<8x128xf32> to vector<8x32xf32>
    %23 = arith.mulf %20, %6 : vector<8x32xf32>
    %24 = arith.mulf %19, %21 : vector<8x32xf32>
    %25 = arith.addf %23, %24 : vector<8x32xf32>
    %26 = math.tanh %25 : vector<8x32xf32>
    %27 = arith.mulf %22, %26 : vector<8x32xf32>
    %c0_15 = arith.constant 0 : index
    %c16 = arith.constant 16 : index
    %28 = vector.load %arg0[%c0_15, %c16] : memref<8x128xf32, #tpu.memory_space<vmem>>, vector<8x16xf32>
    %cst_16 = arith.constant dense<0.000000e+00> : vector<8x128xf32>
    %29 = tpu.matmul %28, %0, %cst_16 {dimension_numbers = #tpu.dot_dimension_numbers<[1], [0], [0], [1], [0, 0, 1, 1], [], []>} : vector<8x16xf32>, vector<16x128xf32>, vector<8x128xf32> -> vector<8x128xf32>
    %30 = vector.broadcast %2 : vector<1x128xf32> to vector<8x128xf32>
    %31 = arith.addf %29, %30 : vector<8x128xf32>
    %cst_17 = arith.constant dense<0.000000e+00> : vector<8x128xf32>
    %32 = tpu.matmul %27, %1, %cst_17 {dimension_numbers = #tpu.dot_dimension_numbers<[1], [0], [0], [1], [0, 0, 1, 1], [], []>} : vector<8x32xf32>, vector<32x128xf32>, vector<8x128xf32> -> vector<8x128xf32>
    %33 = arith.addf %31, %32 : vector<8x128xf32>
    %34 = arith.negf %33 : vector<8x128xf32>
    %35 = math.exp %34 : vector<8x128xf32>
    %cst_18 = arith.constant 1.000000e+00 : f32
    %36 = vector.broadcast %cst_18 : f32 to vector<8x128xf32>
    %37 = arith.addf %36, %35 : vector<8x128xf32>
    %38 = arith.divf %36, %37 : vector<8x128xf32>
    %39 = math.tanh %33 : vector<8x128xf32>
    %40 = vector.extract_strided_slice %38 {offsets = [0, 0], sizes = [8, 32], strides = [1, 1]} : vector<8x128xf32> to vector<8x32xf32>
    %41 = vector.extract_strided_slice %38 {offsets = [0, 32], sizes = [8, 32], strides = [1, 1]} : vector<8x128xf32> to vector<8x32xf32>
    %42 = vector.extract_strided_slice %39 {offsets = [0, 64], sizes = [8, 32], strides = [1, 1]} : vector<8x128xf32> to vector<8x32xf32>
    %43 = vector.extract_strided_slice %38 {offsets = [0, 96], sizes = [8, 32], strides = [1, 1]} : vector<8x128xf32> to vector<8x32xf32>
    %44 = arith.mulf %41, %25 : vector<8x32xf32>
    %45 = arith.mulf %40, %42 : vector<8x32xf32>
    %46 = arith.addf %44, %45 : vector<8x32xf32>
    %47 = math.tanh %46 : vector<8x32xf32>
    %48 = arith.mulf %43, %47 : vector<8x32xf32>
    %c0_19 = arith.constant 0 : index
    %c32 = arith.constant 32 : index
    %49 = vector.load %arg0[%c0_19, %c32] : memref<8x128xf32, #tpu.memory_space<vmem>>, vector<8x16xf32>
    %cst_20 = arith.constant dense<0.000000e+00> : vector<8x128xf32>
    %50 = tpu.matmul %49, %0, %cst_20 {dimension_numbers = #tpu.dot_dimension_numbers<[1], [0], [0], [1], [0, 0, 1, 1], [], []>} : vector<8x16xf32>, vector<16x128xf32>, vector<8x128xf32> -> vector<8x128xf32>
    %51 = vector.broadcast %2 : vector<1x128xf32> to vector<8x128xf32>
    %52 = arith.addf %50, %51 : vector<8x128xf32>
    %cst_21 = arith.constant dense<0.000000e+00> : vector<8x128xf32>
    %53 = tpu.matmul %48, %1, %cst_21 {dimension_numbers = #tpu.dot_dimension_numbers<[1], [0], [0], [1], [0, 0, 1, 1], [], []>} : vector<8x32xf32>, vector<32x128xf32>, vector<8x128xf32> -> vector<8x128xf32>
    %54 = arith.addf %52, %53 : vector<8x128xf32>
    %55 = arith.negf %54 : vector<8x128xf32>
    %56 = math.exp %55 : vector<8x128xf32>
    %cst_22 = arith.constant 1.000000e+00 : f32
    %57 = vector.broadcast %cst_22 : f32 to vector<8x128xf32>
    %58 = arith.addf %57, %56 : vector<8x128xf32>
    %59 = arith.divf %57, %58 : vector<8x128xf32>
    %60 = math.tanh %54 : vector<8x128xf32>
    %61 = vector.extract_strided_slice %59 {offsets = [0, 0], sizes = [8, 32], strides = [1, 1]} : vector<8x128xf32> to vector<8x32xf32>
    %62 = vector.extract_strided_slice %59 {offsets = [0, 32], sizes = [8, 32], strides = [1, 1]} : vector<8x128xf32> to vector<8x32xf32>
    %63 = vector.extract_strided_slice %60 {offsets = [0, 64], sizes = [8, 32], strides = [1, 1]} : vector<8x128xf32> to vector<8x32xf32>
    %64 = vector.extract_strided_slice %59 {offsets = [0, 96], sizes = [8, 32], strides = [1, 1]} : vector<8x128xf32> to vector<8x32xf32>
    %65 = arith.mulf %62, %46 : vector<8x32xf32>
    %66 = arith.mulf %61, %63 : vector<8x32xf32>
    %67 = arith.addf %65, %66 : vector<8x32xf32>
    %68 = math.tanh %67 : vector<8x32xf32>
    %69 = arith.mulf %64, %68 : vector<8x32xf32>
    %c0_23 = arith.constant 0 : index
    %c48 = arith.constant 48 : index
    %70 = vector.load %arg0[%c0_23, %c48] : memref<8x128xf32, #tpu.memory_space<vmem>>, vector<8x16xf32>
    %cst_24 = arith.constant dense<0.000000e+00> : vector<8x128xf32>
    %71 = tpu.matmul %70, %0, %cst_24 {dimension_numbers = #tpu.dot_dimension_numbers<[1], [0], [0], [1], [0, 0, 1, 1], [], []>} : vector<8x16xf32>, vector<16x128xf32>, vector<8x128xf32> -> vector<8x128xf32>
    %72 = vector.broadcast %2 : vector<1x128xf32> to vector<8x128xf32>
    %73 = arith.addf %71, %72 : vector<8x128xf32>
    %cst_25 = arith.constant dense<0.000000e+00> : vector<8x128xf32>
    %74 = tpu.matmul %69, %1, %cst_25 {dimension_numbers = #tpu.dot_dimension_numbers<[1], [0], [0], [1], [0, 0, 1, 1], [], []>} : vector<8x32xf32>, vector<32x128xf32>, vector<8x128xf32> -> vector<8x128xf32>
    %75 = arith.addf %73, %74 : vector<8x128xf32>
    %76 = arith.negf %75 : vector<8x128xf32>
    %77 = math.exp %76 : vector<8x128xf32>
    %cst_26 = arith.constant 1.000000e+00 : f32
    %78 = vector.broadcast %cst_26 : f32 to vector<8x128xf32>
    %79 = arith.addf %78, %77 : vector<8x128xf32>
    %80 = arith.divf %78, %79 : vector<8x128xf32>
    %81 = math.tanh %75 : vector<8x128xf32>
    %82 = vector.extract_strided_slice %80 {offsets = [0, 0], sizes = [8, 32], strides = [1, 1]} : vector<8x128xf32> to vector<8x32xf32>
    %83 = vector.extract_strided_slice %80 {offsets = [0, 32], sizes = [8, 32], strides = [1, 1]} : vector<8x128xf32> to vector<8x32xf32>
    %84 = vector.extract_strided_slice %81 {offsets = [0, 64], sizes = [8, 32], strides = [1, 1]} : vector<8x128xf32> to vector<8x32xf32>
    %85 = vector.extract_strided_slice %80 {offsets = [0, 96], sizes = [8, 32], strides = [1, 1]} : vector<8x128xf32> to vector<8x32xf32>
    %86 = arith.mulf %83, %67 : vector<8x32xf32>
    %87 = arith.mulf %82, %84 : vector<8x32xf32>
    %88 = arith.addf %86, %87 : vector<8x32xf32>
    %89 = math.tanh %88 : vector<8x32xf32>
    %90 = arith.mulf %85, %89 : vector<8x32xf32>
    %c0_27 = arith.constant 0 : index
    %c64 = arith.constant 64 : index
    %91 = vector.load %arg0[%c0_27, %c64] : memref<8x128xf32, #tpu.memory_space<vmem>>, vector<8x16xf32>
    %cst_28 = arith.constant dense<0.000000e+00> : vector<8x128xf32>
    %92 = tpu.matmul %91, %0, %cst_28 {dimension_numbers = #tpu.dot_dimension_numbers<[1], [0], [0], [1], [0, 0, 1, 1], [], []>} : vector<8x16xf32>, vector<16x128xf32>, vector<8x128xf32> -> vector<8x128xf32>
    %93 = vector.broadcast %2 : vector<1x128xf32> to vector<8x128xf32>
    %94 = arith.addf %92, %93 : vector<8x128xf32>
    %cst_29 = arith.constant dense<0.000000e+00> : vector<8x128xf32>
    %95 = tpu.matmul %90, %1, %cst_29 {dimension_numbers = #tpu.dot_dimension_numbers<[1], [0], [0], [1], [0, 0, 1, 1], [], []>} : vector<8x32xf32>, vector<32x128xf32>, vector<8x128xf32> -> vector<8x128xf32>
    %96 = arith.addf %94, %95 : vector<8x128xf32>
    %97 = arith.negf %96 : vector<8x128xf32>
    %98 = math.exp %97 : vector<8x128xf32>
    %cst_30 = arith.constant 1.000000e+00 : f32
    %99 = vector.broadcast %cst_30 : f32 to vector<8x128xf32>
    %100 = arith.addf %99, %98 : vector<8x128xf32>
    %101 = arith.divf %99, %100 : vector<8x128xf32>
    %102 = math.tanh %96 : vector<8x128xf32>
    %103 = vector.extract_strided_slice %101 {offsets = [0, 0], sizes = [8, 32], strides = [1, 1]} : vector<8x128xf32> to vector<8x32xf32>
    %104 = vector.extract_strided_slice %101 {offsets = [0, 32], sizes = [8, 32], strides = [1, 1]} : vector<8x128xf32> to vector<8x32xf32>
    %105 = vector.extract_strided_slice %102 {offsets = [0, 64], sizes = [8, 32], strides = [1, 1]} : vector<8x128xf32> to vector<8x32xf32>
    %106 = vector.extract_strided_slice %101 {offsets = [0, 96], sizes = [8, 32], strides = [1, 1]} : vector<8x128xf32> to vector<8x32xf32>
    %107 = arith.mulf %104, %88 : vector<8x32xf32>
    %108 = arith.mulf %103, %105 : vector<8x32xf32>
    %109 = arith.addf %107, %108 : vector<8x32xf32>
    %110 = math.tanh %109 : vector<8x32xf32>
    %111 = arith.mulf %106, %110 : vector<8x32xf32>
    %c0_31 = arith.constant 0 : index
    %c80 = arith.constant 80 : index
    %112 = vector.load %arg0[%c0_31, %c80] : memref<8x128xf32, #tpu.memory_space<vmem>>, vector<8x16xf32>
    %cst_32 = arith.constant dense<0.000000e+00> : vector<8x128xf32>
    %113 = tpu.matmul %112, %0, %cst_32 {dimension_numbers = #tpu.dot_dimension_numbers<[1], [0], [0], [1], [0, 0, 1, 1], [], []>} : vector<8x16xf32>, vector<16x128xf32>, vector<8x128xf32> -> vector<8x128xf32>
    %114 = vector.broadcast %2 : vector<1x128xf32> to vector<8x128xf32>
    %115 = arith.addf %113, %114 : vector<8x128xf32>
    %cst_33 = arith.constant dense<0.000000e+00> : vector<8x128xf32>
    %116 = tpu.matmul %111, %1, %cst_33 {dimension_numbers = #tpu.dot_dimension_numbers<[1], [0], [0], [1], [0, 0, 1, 1], [], []>} : vector<8x32xf32>, vector<32x128xf32>, vector<8x128xf32> -> vector<8x128xf32>
    %117 = arith.addf %115, %116 : vector<8x128xf32>
    %118 = arith.negf %117 : vector<8x128xf32>
    %119 = math.exp %118 : vector<8x128xf32>
    %cst_34 = arith.constant 1.000000e+00 : f32
    %120 = vector.broadcast %cst_34 : f32 to vector<8x128xf32>
    %121 = arith.addf %120, %119 : vector<8x128xf32>
    %122 = arith.divf %120, %121 : vector<8x128xf32>
    %123 = math.tanh %117 : vector<8x128xf32>
    %124 = vector.extract_strided_slice %122 {offsets = [0, 0], sizes = [8, 32], strides = [1, 1]} : vector<8x128xf32> to vector<8x32xf32>
    %125 = vector.extract_strided_slice %122 {offsets = [0, 32], sizes = [8, 32], strides = [1, 1]} : vector<8x128xf32> to vector<8x32xf32>
    %126 = vector.extract_strided_slice %123 {offsets = [0, 64], sizes = [8, 32], strides = [1, 1]} : vector<8x128xf32> to vector<8x32xf32>
    %127 = vector.extract_strided_slice %122 {offsets = [0, 96], sizes = [8, 32], strides = [1, 1]} : vector<8x128xf32> to vector<8x32xf32>
    %128 = arith.mulf %125, %109 : vector<8x32xf32>
    %129 = arith.mulf %124, %126 : vector<8x32xf32>
    %130 = arith.addf %128, %129 : vector<8x32xf32>
    %131 = math.tanh %130 : vector<8x32xf32>
    %132 = arith.mulf %127, %131 : vector<8x32xf32>
    %c0_35 = arith.constant 0 : index
    %c96 = arith.constant 96 : index
    %133 = vector.load %arg0[%c0_35, %c96] : memref<8x128xf32, #tpu.memory_space<vmem>>, vector<8x16xf32>
    %cst_36 = arith.constant dense<0.000000e+00> : vector<8x128xf32>
    %134 = tpu.matmul %133, %0, %cst_36 {dimension_numbers = #tpu.dot_dimension_numbers<[1], [0], [0], [1], [0, 0, 1, 1], [], []>} : vector<8x16xf32>, vector<16x128xf32>, vector<8x128xf32> -> vector<8x128xf32>
    %135 = vector.broadcast %2 : vector<1x128xf32> to vector<8x128xf32>
    %136 = arith.addf %134, %135 : vector<8x128xf32>
    %cst_37 = arith.constant dense<0.000000e+00> : vector<8x128xf32>
    %137 = tpu.matmul %132, %1, %cst_37 {dimension_numbers = #tpu.dot_dimension_numbers<[1], [0], [0], [1], [0, 0, 1, 1], [], []>} : vector<8x32xf32>, vector<32x128xf32>, vector<8x128xf32> -> vector<8x128xf32>
    %138 = arith.addf %136, %137 : vector<8x128xf32>
    %139 = arith.negf %138 : vector<8x128xf32>
    %140 = math.exp %139 : vector<8x128xf32>
    %cst_38 = arith.constant 1.000000e+00 : f32
    %141 = vector.broadcast %cst_38 : f32 to vector<8x128xf32>
    %142 = arith.addf %141, %140 : vector<8x128xf32>
    %143 = arith.divf %141, %142 : vector<8x128xf32>
    %144 = math.tanh %138 : vector<8x128xf32>
    %145 = vector.extract_strided_slice %143 {offsets = [0, 0], sizes = [8, 32], strides = [1, 1]} : vector<8x128xf32> to vector<8x32xf32>
    %146 = vector.extract_strided_slice %143 {offsets = [0, 32], sizes = [8, 32], strides = [1, 1]} : vector<8x128xf32> to vector<8x32xf32>
    %147 = vector.extract_strided_slice %144 {offsets = [0, 64], sizes = [8, 32], strides = [1, 1]} : vector<8x128xf32> to vector<8x32xf32>
    %148 = vector.extract_strided_slice %143 {offsets = [0, 96], sizes = [8, 32], strides = [1, 1]} : vector<8x128xf32> to vector<8x32xf32>
    %149 = arith.mulf %146, %130 : vector<8x32xf32>
    %150 = arith.mulf %145, %147 : vector<8x32xf32>
    %151 = arith.addf %149, %150 : vector<8x32xf32>
    %152 = math.tanh %151 : vector<8x32xf32>
    %153 = arith.mulf %148, %152 : vector<8x32xf32>
    %c0_39 = arith.constant 0 : index
    %c112 = arith.constant 112 : index
    %154 = vector.load %arg0[%c0_39, %c112] : memref<8x128xf32, #tpu.memory_space<vmem>>, vector<8x16xf32>
    %cst_40 = arith.constant dense<0.000000e+00> : vector<8x128xf32>
    %155 = tpu.matmul %154, %0, %cst_40 {dimension_numbers = #tpu.dot_dimension_numbers<[1], [0], [0], [1], [0, 0, 1, 1], [], []>} : vector<8x16xf32>, vector<16x128xf32>, vector<8x128xf32> -> vector<8x128xf32>
    %156 = vector.broadcast %2 : vector<1x128xf32> to vector<8x128xf32>
    %157 = arith.addf %155, %156 : vector<8x128xf32>
    %cst_41 = arith.constant dense<0.000000e+00> : vector<8x128xf32>
    %158 = tpu.matmul %153, %1, %cst_41 {dimension_numbers = #tpu.dot_dimension_numbers<[1], [0], [0], [1], [0, 0, 1, 1], [], []>} : vector<8x32xf32>, vector<32x128xf32>, vector<8x128xf32> -> vector<8x128xf32>
    %159 = arith.addf %157, %158 : vector<8x128xf32>
    %160 = arith.negf %159 : vector<8x128xf32>
    %161 = math.exp %160 : vector<8x128xf32>
    %cst_42 = arith.constant 1.000000e+00 : f32
    %162 = vector.broadcast %cst_42 : f32 to vector<8x128xf32>
    %163 = arith.addf %162, %161 : vector<8x128xf32>
    %164 = arith.divf %162, %163 : vector<8x128xf32>
    %165 = math.tanh %159 : vector<8x128xf32>
    %166 = vector.extract_strided_slice %164 {offsets = [0, 0], sizes = [8, 32], strides = [1, 1]} : vector<8x128xf32> to vector<8x32xf32>
    %167 = vector.extract_strided_slice %164 {offsets = [0, 32], sizes = [8, 32], strides = [1, 1]} : vector<8x128xf32> to vector<8x32xf32>
    %168 = vector.extract_strided_slice %165 {offsets = [0, 64], sizes = [8, 32], strides = [1, 1]} : vector<8x128xf32> to vector<8x32xf32>
    %169 = vector.extract_strided_slice %164 {offsets = [0, 96], sizes = [8, 32], strides = [1, 1]} : vector<8x128xf32> to vector<8x32xf32>
    %170 = arith.mulf %167, %151 : vector<8x32xf32>
    %171 = arith.mulf %166, %168 : vector<8x32xf32>
    %172 = arith.addf %170, %171 : vector<8x32xf32>
    %173 = math.tanh %172 : vector<8x32xf32>
    %174 = arith.mulf %169, %173 : vector<8x32xf32>
    %c0_43 = arith.constant 0 : index
    %c0_44 = arith.constant 0 : index
    %c0_45 = arith.constant 0 : index
    %175 = vector.load %arg14[%c0_43, %c0_44, %c0_45] : memref<2x8x32xf32, #tpu.memory_space<vmem>>, vector<1x8x32xf32>
    %176 = vector.shape_cast %175 : vector<1x8x32xf32> to vector<8x32xf32>
    %177 = vector.shape_cast %174 : vector<8x32xf32> to vector<1x8x32xf32>
    tpu.vector_store %arg14[%c0_43, %c0_44, %c0_45], %177 {strides = array<i32>} : memref<2x8x32xf32, #tpu.memory_space<vmem>>, vector<1x8x32xf32>,
    %c0_46 = arith.constant 0 : index
    %c0_47 = arith.constant 0 : index
    %c0_48 = arith.constant 0 : index
    %178 = vector.load %arg15[%c0_46, %c0_47, %c0_48] : memref<2x8x32xf32, #tpu.memory_space<vmem>>, vector<1x8x32xf32>
    %179 = vector.shape_cast %178 : vector<1x8x32xf32> to vector<8x32xf32>
    %180 = vector.shape_cast %172 : vector<8x32xf32> to vector<1x8x32xf32>
    tpu.vector_store %arg15[%c0_46, %c0_47, %c0_48], %180 {strides = array<i32>} : memref<2x8x32xf32, #tpu.memory_space<vmem>>, vector<1x8x32xf32>,
    %c0_49 = arith.constant 0 : index
    %c0_50 = arith.constant 0 : index
    %181 = vector.load %arg4[%c0_49, %c0_50] : memref<32x128xf32, #tpu.memory_space<vmem>>, vector<32x128xf32>
    %c0_51 = arith.constant 0 : index
    %c0_52 = arith.constant 0 : index
    %182 = vector.load %arg5[%c0_51, %c0_52] : memref<32x128xf32, #tpu.memory_space<vmem>>, vector<32x128xf32>
    %c0_53 = arith.constant 0 : index
    %c0_54 = arith.constant 0 : index
    %183 = vector.load %arg6[%c0_53, %c0_54] : memref<1x128xf32, #tpu.memory_space<vmem>>, vector<1x128xf32>
    %c1 = arith.constant 1 : index
    %c0_55 = arith.constant 0 : index
    %c0_56 = arith.constant 0 : index
    %184 = vector.load %arg7[%c1, %c0_55, %c0_56] : memref<2x8x32xf32, #tpu.memory_space<vmem>>, vector<1x8x32xf32>
    %185 = vector.shape_cast %184 : vector<1x8x32xf32> to vector<8x32xf32>
    %c1_57 = arith.constant 1 : index
    %c0_58 = arith.constant 0 : index
    %c0_59 = arith.constant 0 : index
    %186 = vector.load %arg8[%c1_57, %c0_58, %c0_59] : memref<2x8x32xf32, #tpu.memory_space<vmem>>, vector<1x8x32xf32>
    %187 = vector.shape_cast %186 : vector<1x8x32xf32> to vector<8x32xf32>
    %cst_60 = arith.constant dense<0.000000e+00> : vector<8x128xf32>
    %188 = tpu.matmul %27, %181, %cst_60 {dimension_numbers = #tpu.dot_dimension_numbers<[1], [0], [0], [1], [0, 0, 1, 1], [], []>} : vector<8x32xf32>, vector<32x128xf32>, vector<8x128xf32> -> vector<8x128xf32>
    %189 = vector.broadcast %183 : vector<1x128xf32> to vector<8x128xf32>
    %190 = arith.addf %188, %189 : vector<8x128xf32>
    %cst_61 = arith.constant dense<0.000000e+00> : vector<8x128xf32>
    %191 = tpu.matmul %185, %182, %cst_61 {dimension_numbers = #tpu.dot_dimension_numbers<[1], [0], [0], [1], [0, 0, 1, 1], [], []>} : vector<8x32xf32>, vector<32x128xf32>, vector<8x128xf32> -> vector<8x128xf32>
    %192 = arith.addf %190, %191 : vector<8x128xf32>
    %193 = arith.negf %192 : vector<8x128xf32>
    %194 = math.exp %193 : vector<8x128xf32>
    %cst_62 = arith.constant 1.000000e+00 : f32
    %195 = vector.broadcast %cst_62 : f32 to vector<8x128xf32>
    %196 = arith.addf %195, %194 : vector<8x128xf32>
    %197 = arith.divf %195, %196 : vector<8x128xf32>
    %198 = math.tanh %192 : vector<8x128xf32>
    %199 = vector.extract_strided_slice %197 {offsets = [0, 0], sizes = [8, 32], strides = [1, 1]} : vector<8x128xf32> to vector<8x32xf32>
    %200 = vector.extract_strided_slice %197 {offsets = [0, 32], sizes = [8, 32], strides = [1, 1]} : vector<8x128xf32> to vector<8x32xf32>
    %201 = vector.extract_strided_slice %198 {offsets = [0, 64], sizes = [8, 32], strides = [1, 1]} : vector<8x128xf32> to vector<8x32xf32>
    %202 = vector.extract_strided_slice %197 {offsets = [0, 96], sizes = [8, 32], strides = [1, 1]} : vector<8x128xf32> to vector<8x32xf32>
    %203 = arith.mulf %200, %187 : vector<8x32xf32>
    %204 = arith.mulf %199, %201 : vector<8x32xf32>
    %205 = arith.addf %203, %204 : vector<8x32xf32>
    %206 = math.tanh %205 : vector<8x32xf32>
    %207 = arith.mulf %202, %206 : vector<8x32xf32>
    %cst_63 = arith.constant dense<0.000000e+00> : vector<8x128xf32>
    %208 = tpu.matmul %48, %181, %cst_63 {dimension_numbers = #tpu.dot_dimension_numbers<[1], [0], [0], [1], [0, 0, 1, 1], [], []>} : vector<8x32xf32>, vector<32x128xf32>, vector<8x128xf32> -> vector<8x128xf32>
    %209 = vector.broadcast %183 : vector<1x128xf32> to vector<8x128xf32>
    %210 = arith.addf %208, %209 : vector<8x128xf32>
    %cst_64 = arith.constant dense<0.000000e+00> : vector<8x128xf32>
    %211 = tpu.matmul %207, %182, %cst_64 {dimension_numbers = #tpu.dot_dimension_numbers<[1], [0], [0], [1], [0, 0, 1, 1], [], []>} : vector<8x32xf32>, vector<32x128xf32>, vector<8x128xf32> -> vector<8x128xf32>
    %212 = arith.addf %210, %211 : vector<8x128xf32>
    %213 = arith.negf %212 : vector<8x128xf32>
    %214 = math.exp %213 : vector<8x128xf32>
    %cst_65 = arith.constant 1.000000e+00 : f32
    %215 = vector.broadcast %cst_65 : f32 to vector<8x128xf32>
    %216 = arith.addf %215, %214 : vector<8x128xf32>
    %217 = arith.divf %215, %216 : vector<8x128xf32>
    %218 = math.tanh %212 : vector<8x128xf32>
    %219 = vector.extract_strided_slice %217 {offsets = [0, 0], sizes = [8, 32], strides = [1, 1]} : vector<8x128xf32> to vector<8x32xf32>
    %220 = vector.extract_strided_slice %217 {offsets = [0, 32], sizes = [8, 32], strides = [1, 1]} : vector<8x128xf32> to vector<8x32xf32>
    %221 = vector.extract_strided_slice %218 {offsets = [0, 64], sizes = [8, 32], strides = [1, 1]} : vector<8x128xf32> to vector<8x32xf32>
    %222 = vector.extract_strided_slice %217 {offsets = [0, 96], sizes = [8, 32], strides = [1, 1]} : vector<8x128xf32> to vector<8x32xf32>
    %223 = arith.mulf %220, %205 : vector<8x32xf32>
    %224 = arith.mulf %219, %221 : vector<8x32xf32>
    %225 = arith.addf %223, %224 : vector<8x32xf32>
    %226 = math.tanh %225 : vector<8x32xf32>
    %227 = arith.mulf %222, %226 : vector<8x32xf32>
    %cst_66 = arith.constant dense<0.000000e+00> : vector<8x128xf32>
    %228 = tpu.matmul %69, %181, %cst_66 {dimension_numbers = #tpu.dot_dimension_numbers<[1], [0], [0], [1], [0, 0, 1, 1], [], []>} : vector<8x32xf32>, vector<32x128xf32>, vector<8x128xf32> -> vector<8x128xf32>
    %229 = vector.broadcast %183 : vector<1x128xf32> to vector<8x128xf32>
    %230 = arith.addf %228, %229 : vector<8x128xf32>
    %cst_67 = arith.constant dense<0.000000e+00> : vector<8x128xf32>
    %231 = tpu.matmul %227, %182, %cst_67 {dimension_numbers = #tpu.dot_dimension_numbers<[1], [0], [0], [1], [0, 0, 1, 1], [], []>} : vector<8x32xf32>, vector<32x128xf32>, vector<8x128xf32> -> vector<8x128xf32>
    %232 = arith.addf %230, %231 : vector<8x128xf32>
    %233 = arith.negf %232 : vector<8x128xf32>
    %234 = math.exp %233 : vector<8x128xf32>
    %cst_68 = arith.constant 1.000000e+00 : f32
    %235 = vector.broadcast %cst_68 : f32 to vector<8x128xf32>
    %236 = arith.addf %235, %234 : vector<8x128xf32>
    %237 = arith.divf %235, %236 : vector<8x128xf32>
    %238 = math.tanh %232 : vector<8x128xf32>
    %239 = vector.extract_strided_slice %237 {offsets = [0, 0], sizes = [8, 32], strides = [1, 1]} : vector<8x128xf32> to vector<8x32xf32>
    %240 = vector.extract_strided_slice %237 {offsets = [0, 32], sizes = [8, 32], strides = [1, 1]} : vector<8x128xf32> to vector<8x32xf32>
    %241 = vector.extract_strided_slice %238 {offsets = [0, 64], sizes = [8, 32], strides = [1, 1]} : vector<8x128xf32> to vector<8x32xf32>
    %242 = vector.extract_strided_slice %237 {offsets = [0, 96], sizes = [8, 32], strides = [1, 1]} : vector<8x128xf32> to vector<8x32xf32>
    %243 = arith.mulf %240, %225 : vector<8x32xf32>
    %244 = arith.mulf %239, %241 : vector<8x32xf32>
    %245 = arith.addf %243, %244 : vector<8x32xf32>
    %246 = math.tanh %245 : vector<8x32xf32>
    %247 = arith.mulf %242, %246 : vector<8x32xf32>
    %cst_69 = arith.constant dense<0.000000e+00> : vector<8x128xf32>
    %248 = tpu.matmul %90, %181, %cst_69 {dimension_numbers = #tpu.dot_dimension_numbers<[1], [0], [0], [1], [0, 0, 1, 1], [], []>} : vector<8x32xf32>, vector<32x128xf32>, vector<8x128xf32> -> vector<8x128xf32>
    %249 = vector.broadcast %183 : vector<1x128xf32> to vector<8x128xf32>
    %250 = arith.addf %248, %249 : vector<8x128xf32>
    %cst_70 = arith.constant dense<0.000000e+00> : vector<8x128xf32>
    %251 = tpu.matmul %247, %182, %cst_70 {dimension_numbers = #tpu.dot_dimension_numbers<[1], [0], [0], [1], [0, 0, 1, 1], [], []>} : vector<8x32xf32>, vector<32x128xf32>, vector<8x128xf32> -> vector<8x128xf32>
    %252 = arith.addf %250, %251 : vector<8x128xf32>
    %253 = arith.negf %252 : vector<8x128xf32>
    %254 = math.exp %253 : vector<8x128xf32>
    %cst_71 = arith.constant 1.000000e+00 : f32
    %255 = vector.broadcast %cst_71 : f32 to vector<8x128xf32>
    %256 = arith.addf %255, %254 : vector<8x128xf32>
    %257 = arith.divf %255, %256 : vector<8x128xf32>
    %258 = math.tanh %252 : vector<8x128xf32>
    %259 = vector.extract_strided_slice %257 {offsets = [0, 0], sizes = [8, 32], strides = [1, 1]} : vector<8x128xf32> to vector<8x32xf32>
    %260 = vector.extract_strided_slice %257 {offsets = [0, 32], sizes = [8, 32], strides = [1, 1]} : vector<8x128xf32> to vector<8x32xf32>
    %261 = vector.extract_strided_slice %258 {offsets = [0, 64], sizes = [8, 32], strides = [1, 1]} : vector<8x128xf32> to vector<8x32xf32>
    %262 = vector.extract_strided_slice %257 {offsets = [0, 96], sizes = [8, 32], strides = [1, 1]} : vector<8x128xf32> to vector<8x32xf32>
    %263 = arith.mulf %260, %245 : vector<8x32xf32>
    %264 = arith.mulf %259, %261 : vector<8x32xf32>
    %265 = arith.addf %263, %264 : vector<8x32xf32>
    %266 = math.tanh %265 : vector<8x32xf32>
    %267 = arith.mulf %262, %266 : vector<8x32xf32>
    %cst_72 = arith.constant dense<0.000000e+00> : vector<8x128xf32>
    %268 = tpu.matmul %111, %181, %cst_72 {dimension_numbers = #tpu.dot_dimension_numbers<[1], [0], [0], [1], [0, 0, 1, 1], [], []>} : vector<8x32xf32>, vector<32x128xf32>, vector<8x128xf32> -> vector<8x128xf32>
    %269 = vector.broadcast %183 : vector<1x128xf32> to vector<8x128xf32>
    %270 = arith.addf %268, %269 : vector<8x128xf32>
    %cst_73 = arith.constant dense<0.000000e+00> : vector<8x128xf32>
    %271 = tpu.matmul %267, %182, %cst_73 {dimension_numbers = #tpu.dot_dimension_numbers<[1], [0], [0], [1], [0, 0, 1, 1], [], []>} : vector<8x32xf32>, vector<32x128xf32>, vector<8x128xf32> -> vector<8x128xf32>
    %272 = arith.addf %270, %271 : vector<8x128xf32>
    %273 = arith.negf %272 : vector<8x128xf32>
    %274 = math.exp %273 : vector<8x128xf32>
    %cst_74 = arith.constant 1.000000e+00 : f32
    %275 = vector.broadcast %cst_74 : f32 to vector<8x128xf32>
    %276 = arith.addf %275, %274 : vector<8x128xf32>
    %277 = arith.divf %275, %276 : vector<8x128xf32>
    %278 = math.tanh %272 : vector<8x128xf32>
    %279 = vector.extract_strided_slice %277 {offsets = [0, 0], sizes = [8, 32], strides = [1, 1]} : vector<8x128xf32> to vector<8x32xf32>
    %280 = vector.extract_strided_slice %277 {offsets = [0, 32], sizes = [8, 32], strides = [1, 1]} : vector<8x128xf32> to vector<8x32xf32>
    %281 = vector.extract_strided_slice %278 {offsets = [0, 64], sizes = [8, 32], strides = [1, 1]} : vector<8x128xf32> to vector<8x32xf32>
    %282 = vector.extract_strided_slice %277 {offsets = [0, 96], sizes = [8, 32], strides = [1, 1]} : vector<8x128xf32> to vector<8x32xf32>
    %283 = arith.mulf %280, %265 : vector<8x32xf32>
    %284 = arith.mulf %279, %281 : vector<8x32xf32>
    %285 = arith.addf %283, %284 : vector<8x32xf32>
    %286 = math.tanh %285 : vector<8x32xf32>
    %287 = arith.mulf %282, %286 : vector<8x32xf32>
    %cst_75 = arith.constant dense<0.000000e+00> : vector<8x128xf32>
    %288 = tpu.matmul %132, %181, %cst_75 {dimension_numbers = #tpu.dot_dimension_numbers<[1], [0], [0], [1], [0, 0, 1, 1], [], []>} : vector<8x32xf32>, vector<32x128xf32>, vector<8x128xf32> -> vector<8x128xf32>
    %289 = vector.broadcast %183 : vector<1x128xf32> to vector<8x128xf32>
    %290 = arith.addf %288, %289 : vector<8x128xf32>
    %cst_76 = arith.constant dense<0.000000e+00> : vector<8x128xf32>
    %291 = tpu.matmul %287, %182, %cst_76 {dimension_numbers = #tpu.dot_dimension_numbers<[1], [0], [0], [1], [0, 0, 1, 1], [], []>} : vector<8x32xf32>, vector<32x128xf32>, vector<8x128xf32> -> vector<8x128xf32>
    %292 = arith.addf %290, %291 : vector<8x128xf32>
    %293 = arith.negf %292 : vector<8x128xf32>
    %294 = math.exp %293 : vector<8x128xf32>
    %cst_77 = arith.constant 1.000000e+00 : f32
    %295 = vector.broadcast %cst_77 : f32 to vector<8x128xf32>
    %296 = arith.addf %295, %294 : vector<8x128xf32>
    %297 = arith.divf %295, %296 : vector<8x128xf32>
    %298 = math.tanh %292 : vector<8x128xf32>
    %299 = vector.extract_strided_slice %297 {offsets = [0, 0], sizes = [8, 32], strides = [1, 1]} : vector<8x128xf32> to vector<8x32xf32>
    %300 = vector.extract_strided_slice %297 {offsets = [0, 32], sizes = [8, 32], strides = [1, 1]} : vector<8x128xf32> to vector<8x32xf32>
    %301 = vector.extract_strided_slice %298 {offsets = [0, 64], sizes = [8, 32], strides = [1, 1]} : vector<8x128xf32> to vector<8x32xf32>
    %302 = vector.extract_strided_slice %297 {offsets = [0, 96], sizes = [8, 32], strides = [1, 1]} : vector<8x128xf32> to vector<8x32xf32>
    %303 = arith.mulf %300, %285 : vector<8x32xf32>
    %304 = arith.mulf %299, %301 : vector<8x32xf32>
    %305 = arith.addf %303, %304 : vector<8x32xf32>
    %306 = math.tanh %305 : vector<8x32xf32>
    %307 = arith.mulf %302, %306 : vector<8x32xf32>
    %cst_78 = arith.constant dense<0.000000e+00> : vector<8x128xf32>
    %308 = tpu.matmul %153, %181, %cst_78 {dimension_numbers = #tpu.dot_dimension_numbers<[1], [0], [0], [1], [0, 0, 1, 1], [], []>} : vector<8x32xf32>, vector<32x128xf32>, vector<8x128xf32> -> vector<8x128xf32>
    %309 = vector.broadcast %183 : vector<1x128xf32> to vector<8x128xf32>
    %310 = arith.addf %308, %309 : vector<8x128xf32>
    %cst_79 = arith.constant dense<0.000000e+00> : vector<8x128xf32>
    %311 = tpu.matmul %307, %182, %cst_79 {dimension_numbers = #tpu.dot_dimension_numbers<[1], [0], [0], [1], [0, 0, 1, 1], [], []>} : vector<8x32xf32>, vector<32x128xf32>, vector<8x128xf32> -> vector<8x128xf32>
    %312 = arith.addf %310, %311 : vector<8x128xf32>
    %313 = arith.negf %312 : vector<8x128xf32>
    %314 = math.exp %313 : vector<8x128xf32>
    %cst_80 = arith.constant 1.000000e+00 : f32
    %315 = vector.broadcast %cst_80 : f32 to vector<8x128xf32>
    %316 = arith.addf %315, %314 : vector<8x128xf32>
    %317 = arith.divf %315, %316 : vector<8x128xf32>
    %318 = math.tanh %312 : vector<8x128xf32>
    %319 = vector.extract_strided_slice %317 {offsets = [0, 0], sizes = [8, 32], strides = [1, 1]} : vector<8x128xf32> to vector<8x32xf32>
    %320 = vector.extract_strided_slice %317 {offsets = [0, 32], sizes = [8, 32], strides = [1, 1]} : vector<8x128xf32> to vector<8x32xf32>
    %321 = vector.extract_strided_slice %318 {offsets = [0, 64], sizes = [8, 32], strides = [1, 1]} : vector<8x128xf32> to vector<8x32xf32>
    %322 = vector.extract_strided_slice %317 {offsets = [0, 96], sizes = [8, 32], strides = [1, 1]} : vector<8x128xf32> to vector<8x32xf32>
    %323 = arith.mulf %320, %305 : vector<8x32xf32>
    %324 = arith.mulf %319, %321 : vector<8x32xf32>
    %325 = arith.addf %323, %324 : vector<8x32xf32>
    %326 = math.tanh %325 : vector<8x32xf32>
    %327 = arith.mulf %322, %326 : vector<8x32xf32>
    %cst_81 = arith.constant dense<0.000000e+00> : vector<8x128xf32>
    %328 = tpu.matmul %174, %181, %cst_81 {dimension_numbers = #tpu.dot_dimension_numbers<[1], [0], [0], [1], [0, 0, 1, 1], [], []>} : vector<8x32xf32>, vector<32x128xf32>, vector<8x128xf32> -> vector<8x128xf32>
    %329 = vector.broadcast %183 : vector<1x128xf32> to vector<8x128xf32>
    %330 = arith.addf %328, %329 : vector<8x128xf32>
    %cst_82 = arith.constant dense<0.000000e+00> : vector<8x128xf32>
    %331 = tpu.matmul %327, %182, %cst_82 {dimension_numbers = #tpu.dot_dimension_numbers<[1], [0], [0], [1], [0, 0, 1, 1], [], []>} : vector<8x32xf32>, vector<32x128xf32>, vector<8x128xf32> -> vector<8x128xf32>
    %332 = arith.addf %330, %331 : vector<8x128xf32>
    %333 = arith.negf %332 : vector<8x128xf32>
    %334 = math.exp %333 : vector<8x128xf32>
    %cst_83 = arith.constant 1.000000e+00 : f32
    %335 = vector.broadcast %cst_83 : f32 to vector<8x128xf32>
    %336 = arith.addf %335, %334 : vector<8x128xf32>
    %337 = arith.divf %335, %336 : vector<8x128xf32>
    %338 = math.tanh %332 : vector<8x128xf32>
    %339 = vector.extract_strided_slice %337 {offsets = [0, 0], sizes = [8, 32], strides = [1, 1]} : vector<8x128xf32> to vector<8x32xf32>
    %340 = vector.extract_strided_slice %337 {offsets = [0, 32], sizes = [8, 32], strides = [1, 1]} : vector<8x128xf32> to vector<8x32xf32>
    %341 = vector.extract_strided_slice %338 {offsets = [0, 64], sizes = [8, 32], strides = [1, 1]} : vector<8x128xf32> to vector<8x32xf32>
    %342 = vector.extract_strided_slice %337 {offsets = [0, 96], sizes = [8, 32], strides = [1, 1]} : vector<8x128xf32> to vector<8x32xf32>
    %343 = arith.mulf %340, %325 : vector<8x32xf32>
    %344 = arith.mulf %339, %341 : vector<8x32xf32>
    %345 = arith.addf %343, %344 : vector<8x32xf32>
    %346 = math.tanh %345 : vector<8x32xf32>
    %347 = arith.mulf %342, %346 : vector<8x32xf32>
    %c1_84 = arith.constant 1 : index
    %c0_85 = arith.constant 0 : index
    %c0_86 = arith.constant 0 : index
    %348 = vector.load %arg14[%c1_84, %c0_85, %c0_86] : memref<2x8x32xf32, #tpu.memory_space<vmem>>, vector<1x8x32xf32>
    %349 = vector.shape_cast %348 : vector<1x8x32xf32> to vector<8x32xf32>
    %350 = vector.shape_cast %347 : vector<8x32xf32> to vector<1x8x32xf32>
    tpu.vector_store %arg14[%c1_84, %c0_85, %c0_86], %350 {strides = array<i32>} : memref<2x8x32xf32, #tpu.memory_space<vmem>>, vector<1x8x32xf32>,
    %c1_87 = arith.constant 1 : index
    %c0_88 = arith.constant 0 : index
    %c0_89 = arith.constant 0 : index
    %351 = vector.load %arg15[%c1_87, %c0_88, %c0_89] : memref<2x8x32xf32, #tpu.memory_space<vmem>>, vector<1x8x32xf32>
    %352 = vector.shape_cast %351 : vector<1x8x32xf32> to vector<8x32xf32>
    %353 = vector.shape_cast %345 : vector<8x32xf32> to vector<1x8x32xf32>
    tpu.vector_store %arg15[%c1_87, %c0_88, %c0_89], %353 {strides = array<i32>} : memref<2x8x32xf32, #tpu.memory_space<vmem>>, vector<1x8x32xf32>,
    %c0_90 = arith.constant 0 : index
    %c0_91 = arith.constant 0 : index
    %354 = vector.load %arg9[%c0_90, %c0_91] : memref<32x32xf32, #tpu.memory_space<vmem>>, vector<32x32xf32>
    %c0_92 = arith.constant 0 : index
    %c0_93 = arith.constant 0 : index
    %355 = vector.load %arg10[%c0_92, %c0_93] : memref<1x32xf32, #tpu.memory_space<vmem>>, vector<1x32xf32>
    %c0_94 = arith.constant 0 : index
    %c0_95 = arith.constant 0 : index
    %356 = vector.load %arg11[%c0_94, %c0_95] : memref<32x128xf32, #tpu.memory_space<vmem>>, vector<32x128xf32>
    %c0_96 = arith.constant 0 : index
    %c0_97 = arith.constant 0 : index
    %357 = vector.load %arg12[%c0_96, %c0_97] : memref<1x128xf32, #tpu.memory_space<vmem>>, vector<1x128xf32>
    %cst_98 = arith.constant dense<0.000000e+00> : vector<8x32xf32>
    %358 = tpu.matmul %207, %354, %cst_98 {dimension_numbers = #tpu.dot_dimension_numbers<[1], [0], [0], [1], [0, 0, 1, 1], [], []>} : vector<8x32xf32>, vector<32x32xf32>, vector<8x32xf32> -> vector<8x32xf32>
    %359 = vector.broadcast %355 : vector<1x32xf32> to vector<8x32xf32>
    %360 = arith.addf %358, %359 : vector<8x32xf32>
    %361 = math.tanh %360 : vector<8x32xf32>
    %cst_99 = arith.constant dense<0.000000e+00> : vector<8x128xf32>
    %362 = tpu.matmul %361, %356, %cst_99 {dimension_numbers = #tpu.dot_dimension_numbers<[1], [0], [0], [1], [0, 0, 1, 1], [], []>} : vector<8x32xf32>, vector<32x128xf32>, vector<8x128xf32> -> vector<8x128xf32>
    %363 = vector.broadcast %357 : vector<1x128xf32> to vector<8x128xf32>
    %364 = arith.addf %362, %363 : vector<8x128xf32>
    %c0_100 = arith.constant 0 : index
    %c0_101 = arith.constant 0 : index
    %365 = vector.load %arg13[%c0_100, %c0_101] : memref<8x1024xf32, #tpu.memory_space<vmem>>, vector<8x128xf32>
    tpu.vector_store %arg13[%c0_100, %c0_101], %364 {strides = array<i32>} : memref<8x1024xf32, #tpu.memory_space<vmem>>, vector<8x128xf32>,
    %cst_102 = arith.constant dense<0.000000e+00> : vector<8x32xf32>
    %366 = tpu.matmul %227, %354, %cst_102 {dimension_numbers = #tpu.dot_dimension_numbers<[1], [0], [0], [1], [0, 0, 1, 1], [], []>} : vector<8x32xf32>, vector<32x32xf32>, vector<8x32xf32> -> vector<8x32xf32>
    %367 = vector.broadcast %355 : vector<1x32xf32> to vector<8x32xf32>
    %368 = arith.addf %366, %367 : vector<8x32xf32>
    %369 = math.tanh %368 : vector<8x32xf32>
    %cst_103 = arith.constant dense<0.000000e+00> : vector<8x128xf32>
    %370 = tpu.matmul %369, %356, %cst_103 {dimension_numbers = #tpu.dot_dimension_numbers<[1], [0], [0], [1], [0, 0, 1, 1], [], []>} : vector<8x32xf32>, vector<32x128xf32>, vector<8x128xf32> -> vector<8x128xf32>
    %371 = vector.broadcast %357 : vector<1x128xf32> to vector<8x128xf32>
    %372 = arith.addf %370, %371 : vector<8x128xf32>
    %c0_104 = arith.constant 0 : index
    %c128 = arith.constant 128 : index
    %373 = vector.load %arg13[%c0_104, %c128] : memref<8x1024xf32, #tpu.memory_space<vmem>>, vector<8x128xf32>
    tpu.vector_store %arg13[%c0_104, %c128], %372 {strides = array<i32>} : memref<8x1024xf32, #tpu.memory_space<vmem>>, vector<8x128xf32>,
    %cst_105 = arith.constant dense<0.000000e+00> : vector<8x32xf32>
    %374 = tpu.matmul %247, %354, %cst_105 {dimension_numbers = #tpu.dot_dimension_numbers<[1], [0], [0], [1], [0, 0, 1, 1], [], []>} : vector<8x32xf32>, vector<32x32xf32>, vector<8x32xf32> -> vector<8x32xf32>
    %375 = vector.broadcast %355 : vector<1x32xf32> to vector<8x32xf32>
    %376 = arith.addf %374, %375 : vector<8x32xf32>
    %377 = math.tanh %376 : vector<8x32xf32>
    %cst_106 = arith.constant dense<0.000000e+00> : vector<8x128xf32>
    %378 = tpu.matmul %377, %356, %cst_106 {dimension_numbers = #tpu.dot_dimension_numbers<[1], [0], [0], [1], [0, 0, 1, 1], [], []>} : vector<8x32xf32>, vector<32x128xf32>, vector<8x128xf32> -> vector<8x128xf32>
    %379 = vector.broadcast %357 : vector<1x128xf32> to vector<8x128xf32>
    %380 = arith.addf %378, %379 : vector<8x128xf32>
    %c0_107 = arith.constant 0 : index
    %c256 = arith.constant 256 : index
    %381 = vector.load %arg13[%c0_107, %c256] : memref<8x1024xf32, #tpu.memory_space<vmem>>, vector<8x128xf32>
    tpu.vector_store %arg13[%c0_107, %c256], %380 {strides = array<i32>} : memref<8x1024xf32, #tpu.memory_space<vmem>>, vector<8x128xf32>,
    %cst_108 = arith.constant dense<0.000000e+00> : vector<8x32xf32>
    %382 = tpu.matmul %267, %354, %cst_108 {dimension_numbers = #tpu.dot_dimension_numbers<[1], [0], [0], [1], [0, 0, 1, 1], [], []>} : vector<8x32xf32>, vector<32x32xf32>, vector<8x32xf32> -> vector<8x32xf32>
    %383 = vector.broadcast %355 : vector<1x32xf32> to vector<8x32xf32>
    %384 = arith.addf %382, %383 : vector<8x32xf32>
    %385 = math.tanh %384 : vector<8x32xf32>
    %cst_109 = arith.constant dense<0.000000e+00> : vector<8x128xf32>
    %386 = tpu.matmul %385, %356, %cst_109 {dimension_numbers = #tpu.dot_dimension_numbers<[1], [0], [0], [1], [0, 0, 1, 1], [], []>} : vector<8x32xf32>, vector<32x128xf32>, vector<8x128xf32> -> vector<8x128xf32>
    %387 = vector.broadcast %357 : vector<1x128xf32> to vector<8x128xf32>
    %388 = arith.addf %386, %387 : vector<8x128xf32>
    %c0_110 = arith.constant 0 : index
    %c384 = arith.constant 384 : index
    %389 = vector.load %arg13[%c0_110, %c384] : memref<8x1024xf32, #tpu.memory_space<vmem>>, vector<8x128xf32>
    tpu.vector_store %arg13[%c0_110, %c384], %388 {strides = array<i32>} : memref<8x1024xf32, #tpu.memory_space<vmem>>, vector<8x128xf32>,
    %cst_111 = arith.constant dense<0.000000e+00> : vector<8x32xf32>
    %390 = tpu.matmul %287, %354, %cst_111 {dimension_numbers = #tpu.dot_dimension_numbers<[1], [0], [0], [1], [0, 0, 1, 1], [], []>} : vector<8x32xf32>, vector<32x32xf32>, vector<8x32xf32> -> vector<8x32xf32>
    %391 = vector.broadcast %355 : vector<1x32xf32> to vector<8x32xf32>
    %392 = arith.addf %390, %391 : vector<8x32xf32>
    %393 = math.tanh %392 : vector<8x32xf32>
    %cst_112 = arith.constant dense<0.000000e+00> : vector<8x128xf32>
    %394 = tpu.matmul %393, %356, %cst_112 {dimension_numbers = #tpu.dot_dimension_numbers<[1], [0], [0], [1], [0, 0, 1, 1], [], []>} : vector<8x32xf32>, vector<32x128xf32>, vector<8x128xf32> -> vector<8x128xf32>
    %395 = vector.broadcast %357 : vector<1x128xf32> to vector<8x128xf32>
    %396 = arith.addf %394, %395 : vector<8x128xf32>
    %c0_113 = arith.constant 0 : index
    %c512 = arith.constant 512 : index
    %397 = vector.load %arg13[%c0_113, %c512] : memref<8x1024xf32, #tpu.memory_space<vmem>>, vector<8x128xf32>
    tpu.vector_store %arg13[%c0_113, %c512], %396 {strides = array<i32>} : memref<8x1024xf32, #tpu.memory_space<vmem>>, vector<8x128xf32>,
    %cst_114 = arith.constant dense<0.000000e+00> : vector<8x32xf32>
    %398 = tpu.matmul %307, %354, %cst_114 {dimension_numbers = #tpu.dot_dimension_numbers<[1], [0], [0], [1], [0, 0, 1, 1], [], []>} : vector<8x32xf32>, vector<32x32xf32>, vector<8x32xf32> -> vector<8x32xf32>
    %399 = vector.broadcast %355 : vector<1x32xf32> to vector<8x32xf32>
    %400 = arith.addf %398, %399 : vector<8x32xf32>
    %401 = math.tanh %400 : vector<8x32xf32>
    %cst_115 = arith.constant dense<0.000000e+00> : vector<8x128xf32>
    %402 = tpu.matmul %401, %356, %cst_115 {dimension_numbers = #tpu.dot_dimension_numbers<[1], [0], [0], [1], [0, 0, 1, 1], [], []>} : vector<8x32xf32>, vector<32x128xf32>, vector<8x128xf32> -> vector<8x128xf32>
    %403 = vector.broadcast %357 : vector<1x128xf32> to vector<8x128xf32>
    %404 = arith.addf %402, %403 : vector<8x128xf32>
    %c0_116 = arith.constant 0 : index
    %c640 = arith.constant 640 : index
    %405 = vector.load %arg13[%c0_116, %c640] : memref<8x1024xf32, #tpu.memory_space<vmem>>, vector<8x128xf32>
    tpu.vector_store %arg13[%c0_116, %c640], %404 {strides = array<i32>} : memref<8x1024xf32, #tpu.memory_space<vmem>>, vector<8x128xf32>,
    %cst_117 = arith.constant dense<0.000000e+00> : vector<8x32xf32>
    %406 = tpu.matmul %327, %354, %cst_117 {dimension_numbers = #tpu.dot_dimension_numbers<[1], [0], [0], [1], [0, 0, 1, 1], [], []>} : vector<8x32xf32>, vector<32x32xf32>, vector<8x32xf32> -> vector<8x32xf32>
    %407 = vector.broadcast %355 : vector<1x32xf32> to vector<8x32xf32>
    %408 = arith.addf %406, %407 : vector<8x32xf32>
    %409 = math.tanh %408 : vector<8x32xf32>
    %cst_118 = arith.constant dense<0.000000e+00> : vector<8x128xf32>
    %410 = tpu.matmul %409, %356, %cst_118 {dimension_numbers = #tpu.dot_dimension_numbers<[1], [0], [0], [1], [0, 0, 1, 1], [], []>} : vector<8x32xf32>, vector<32x128xf32>, vector<8x128xf32> -> vector<8x128xf32>
    %411 = vector.broadcast %357 : vector<1x128xf32> to vector<8x128xf32>
    %412 = arith.addf %410, %411 : vector<8x128xf32>
    %c0_119 = arith.constant 0 : index
    %c768 = arith.constant 768 : index
    %413 = vector.load %arg13[%c0_119, %c768] : memref<8x1024xf32, #tpu.memory_space<vmem>>, vector<8x128xf32>
    tpu.vector_store %arg13[%c0_119, %c768], %412 {strides = array<i32>} : memref<8x1024xf32, #tpu.memory_space<vmem>>, vector<8x128xf32>,
    %cst_120 = arith.constant dense<0.000000e+00> : vector<8x32xf32>
    %414 = tpu.matmul %347, %354, %cst_120 {dimension_numbers = #tpu.dot_dimension_numbers<[1], [0], [0], [1], [0, 0, 1, 1], [], []>} : vector<8x32xf32>, vector<32x32xf32>, vector<8x32xf32> -> vector<8x32xf32>
    %415 = vector.broadcast %355 : vector<1x32xf32> to vector<8x32xf32>
    %416 = arith.addf %414, %415 : vector<8x32xf32>
    %417 = math.tanh %416 : vector<8x32xf32>
    %cst_121 = arith.constant dense<0.000000e+00> : vector<8x128xf32>
    %418 = tpu.matmul %417, %356, %cst_121 {dimension_numbers = #tpu.dot_dimension_numbers<[1], [0], [0], [1], [0, 0, 1, 1], [], []>} : vector<8x32xf32>, vector<32x128xf32>, vector<8x128xf32> -> vector<8x128xf32>
    %419 = vector.broadcast %357 : vector<1x128xf32> to vector<8x128xf32>
    %420 = arith.addf %418, %419 : vector<8x128xf32>
    %c0_122 = arith.constant 0 : index
    %c896 = arith.constant 896 : index
    %421 = vector.load %arg13[%c0_122, %c896] : memref<8x1024xf32, #tpu.memory_space<vmem>>, vector<8x128xf32>
    tpu.vector_store %arg13[%c0_122, %c896], %420 {strides = array<i32>} : memref<8x1024xf32, #tpu.memory_space<vmem>>, vector<8x128xf32>,
    return
  }
}

</mosaic_0001>

<llo_original>
// kernel: tpu_custom_call.1
$region0: #{tpu_custom_call.1}
  #allocation0 [shape = 'u32[]', space=smem, size = 0x4, offset = 0x4, fixed_abs, tag = 'smem constant byte address 0x4 - core index']
  #allocation1 [shape = 'u32[72,128]{1,0:T(1,128)}', space=vmem, size = 0x9000, scoped, tag = 'internal scratch']
  %s0 = inlined_call_operand.hbm [shape: f32[8,128], index: 0, kind: input, shape index: {}]
  %s1 = inlined_call_operand.hbm [shape: f32[16,128], index: 1, kind: input, shape index: {}]
  %s2 = inlined_call_operand.hbm [shape: f32[32,128], index: 2, kind: input, shape index: {}]
  %s3 = inlined_call_operand.vmem [shape: f32[1,128], index: 3, kind: input, shape index: {}]
  %s4 = inlined_call_operand.hbm [shape: f32[32,128], index: 4, kind: input, shape index: {}]
  %s5 = inlined_call_operand.hbm [shape: f32[32,128], index: 5, kind: input, shape index: {}]
  %s6 = inlined_call_operand.vmem [shape: f32[1,128], index: 6, kind: input, shape index: {}]
  %s7 = inlined_call_operand.hbm [shape: f32[2,8,32], index: 7, kind: input, shape index: {}]
  %s8 = inlined_call_operand.hbm [shape: f32[2,8,32], index: 8, kind: input, shape index: {}]
  %s9 = inlined_call_operand.hbm [shape: f32[32,32], index: 9, kind: input, shape index: {}]
  %s10 = inlined_call_operand.vmem [shape: f32[1,32], index: 10, kind: input, shape index: {}]
  %s11 = inlined_call_operand.hbm [shape: f32[32,128], index: 11, kind: input, shape index: {}]
  %s12 = inlined_call_operand.vmem [shape: f32[1,128], index: 12, kind: input, shape index: {}]
  %s13 = inlined_call_operand.hbm [shape: f32[8,1024], index: 13, kind: output, shape index: {0}]
  %s14 = inlined_call_operand.hbm [shape: f32[2,8,32], index: 14, kind: output, shape index: {1}]
  %s15 = inlined_call_operand.hbm [shape: f32[2,8,32], index: 15, kind: output, shape index: {2}]
  %16 = xla_tuple %s13, %s14, %s15
  %s17 = sld [smem:[#allocation0]]
  $region114: #{tpu_custom_call.1} parent=0
    _
  %s19 = ssub.s32 1, %s17
  %s20 = scalar_select 0, %s19, %s17
  $region1: #{tpu_custom_call.1} parent=0
    #allocation2 [shape = 'u8[4096]{0}', space=vmem, size = 0x1000, scoped, tag = 'input window, operand 0, single buffered']
    #allocation3 [shape = 's32[1]{0}', space=sflag, size = 0x4, scoped, tag = 'scoped memory for tpu_custom_call.1']
    #allocation4 [shape = 's32[1]{0}', space=sflag, size = 0x4, scoped, tag = 'scoped memory for tpu_custom_call.1']
    #allocation5 [shape = 'u8[8192]{0}', space=vmem, size = 0x2000, scoped, tag = 'input window, operand 1, single buffered']
    #allocation6 [shape = 's32[1]{0}', space=sflag, size = 0x4, scoped, tag = 'scoped memory for tpu_custom_call.1']
    #allocation7 [shape = 'u8[16384]{0}', space=vmem, size = 0x4000, scoped, tag = 'input window, operand 2, single buffered']
    #allocation8 [shape = 'u8[16384]{0}', space=vmem, size = 0x4000, scoped, tag = 'input window, operand 4, single buffered']
    #allocation9 [shape = 's32[1]{0}', space=sflag, size = 0x4, scoped, tag = 'scoped memory for tpu_custom_call.1']
    #allocation10 [shape = 'u8[16384]{0}', space=vmem, size = 0x4000, scoped, tag = 'input window, operand 5, single buffered']
    #allocation11 [shape = 'u8[8192]{0}', space=vmem, size = 0x2000, scoped, tag = 'input window, operand 7, single buffered']
    #allocation12 [shape = 's32[1]{0}', space=sflag, size = 0x4, scoped, tag = 'scoped memory for tpu_custom_call.1']
    #allocation13 [shape = 'u8[8192]{0}', space=vmem, size = 0x2000, scoped, tag = 'input window, operand 8, single buffered']
    #allocation14 [shape = 'u8[16384]{0}', space=vmem, size = 0x4000, scoped, tag = 'input window, operand 9, single buffered']
    #allocation15 [shape = 's32[1]{0}', space=sflag, size = 0x4, scoped, tag = 'scoped memory for tpu_custom_call.1']
    #allocation16 [shape = 'u8[16384]{0}', space=vmem, size = 0x4000, scoped, tag = 'input window, operand 11, single buffered']
    #allocation17 [shape = 'u8[32768]{0}', space=vmem, size = 0x8000, scoped, tag = 'output window, operand 0, single buffered']
    #allocation18 [shape = 'u8[8192]{0}', space=vmem, size = 0x2000, scoped, tag = 'output window, operand 1, single buffered']
    #allocation19 [shape = 's32[1]{0}', space=sflag, size = 0x4, scoped, tag = 'scoped memory for tpu_custom_call.1']
    #allocation20 [shape = 'u8[8192]{0}', space=vmem, size = 0x2000, scoped, tag = 'output window, operand 2, single buffered']
    %21 = vsyncpa [#allocation3], 0
    %22 = vsyncpa [#allocation6], 0
    %23 = vsyncpa [#allocation9], 0
    %24 = vsyncpa [#allocation12], 0
    %25 = vsyncpa [#allocation15], 0
    %26 = vsyncpa [#allocation4], 0
    %27 = vsyncpa [#allocation19], 0
    // Predicated region
    $region2: #{tpu_custom_call.1} parent=1 // pred_check
      _
    $region3: #{tpu_custom_call.1} parent=1 // pred_check_branch
      %29 = sbr.rel (0) target = $region5
    $region4: #{tpu_custom_call.1} parent=1 // pred_region
      %31 = vsyncadd [#allocation3], 0
      %s33 = sshll.u32 %s0, 4
      %s34 = int_to_ptr.hbm [resolvable:$true] %s33
      %s35 = sshll.u32 [#allocation2], 4
      %s36 = int_to_ptr.vmem [resolvable:$true] %s35
      %38 = dma.hbm_to_vmem [thread:$0]  %s34, 128, %s36, [#allocation3]
    $region5: #{tpu_custom_call.1} parent=1 // pred_fallthru
      _
    // Predicated region
    $region6: #{tpu_custom_call.1} parent=1 // pred_check
      _
    $region7: #{tpu_custom_call.1} parent=1 // pred_check_branch
      %40 = sbr.rel (0) target = $region9
    $region8: #{tpu_custom_call.1} parent=1 // pred_region
      %42 = vsyncadd [#allocation6], 0
      %s43 = sshll.u32 %s1, 4
      %s44 = int_to_ptr.hbm [resolvable:$true] %s43
      %s45 = sshll.u32 [#allocation5], 4
      %s46 = int_to_ptr.vmem [resolvable:$true] %s45
      %51 = dma.hbm_to_vmem [thread:$0]  %s44, 256, %s46, [#allocation6], 128, 128, 8
    $region9: #{tpu_custom_call.1} parent=1 // pred_fallthru
      _
    // Predicated region
    $region10: #{tpu_custom_call.1} parent=1 // pred_check
      _
    $region11: #{tpu_custom_call.1} parent=1 // pred_check_branch
      %53 = sbr.rel (0) target = $region13
    $region12: #{tpu_custom_call.1} parent=1 // pred_region
      %55 = vsyncadd [#allocation6], 0
      %s56 = sshll.u32 %s2, 4
      %s57 = int_to_ptr.hbm [resolvable:$true] %s56
      %s58 = sshll.u32 [#allocation7], 4
      %s59 = int_to_ptr.vmem [resolvable:$true] %s58
      %64 = dma.hbm_to_vmem [thread:$0]  %s57, 512, %s59, [#allocation6], 128, 128, 8
    $region13: #{tpu_custom_call.1} parent=1 // pred_fallthru
      _
    // Predicated region
    $region14: #{tpu_custom_call.1} parent=1 // pred_check
      _
    $region15: #{tpu_custom_call.1} parent=1 // pred_check_branch
      %66 = sbr.rel (0) target = $region17
    $region16: #{tpu_custom_call.1} parent=1 // pred_region
      _
    $region17: #{tpu_custom_call.1} parent=1 // pred_fallthru
      _
    // Predicated region
    $region18: #{tpu_custom_call.1} parent=1 // pred_check
      _
    $region19: #{tpu_custom_call.1} parent=1 // pred_check_branch
      %68 = sbr.rel (0) target = $region21
    $region20: #{tpu_custom_call.1} parent=1 // pred_region
      %70 = vsyncadd [#allocation9], 0
      %s71 = sshll.u32 %s4, 4
      %s72 = int_to_ptr.hbm [resolvable:$true] %s71
      %s73 = sshll.u32 [#allocation8], 4
      %s74 = int_to_ptr.vmem [resolvable:$true] %s73
      %79 = dma.hbm_to_vmem [thread:$0]  %s72, 512, %s74, [#allocation9], 128, 128, 8
    $region21: #{tpu_custom_call.1} parent=1 // pred_fallthru
      _
    // Predicated region
    $region22: #{tpu_custom_call.1} parent=1 // pred_check
      _
    $region23: #{tpu_custom_call.1} parent=1 // pred_check_branch
      %81 = sbr.rel (0) target = $region25
    $region24: #{tpu_custom_call.1} parent=1 // pred_region
      %83 = vsyncadd [#allocation9], 0
      %s84 = sshll.u32 %s5, 4
      %s85 = int_to_ptr.hbm [resolvable:$true] %s84
      %s86 = sshll.u32 [#allocation10], 4
      %s87 = int_to_ptr.vmem [resolvable:$true] %s86
      %92 = dma.hbm_to_vmem [thread:$0]  %s85, 512, %s87, [#allocation9], 128, 128, 8
    $region25: #{tpu_custom_call.1} parent=1 // pred_fallthru
      _
    // Predicated region
    $region26: #{tpu_custom_call.1} parent=1 // pred_check
      _
    $region27: #{tpu_custom_call.1} parent=1 // pred_check_branch
      %94 = sbr.rel (0) target = $region29
    $region28: #{tpu_custom_call.1} parent=1 // pred_region
      _
    $region29: #{tpu_custom_call.1} parent=1 // pred_fallthru
      _
    // Predicated region
    $region30: #{tpu_custom_call.1} parent=1 // pred_check
      _
    $region31: #{tpu_custom_call.1} parent=1 // pred_check_branch
      %96 = sbr.rel (0) target = $region33
    $region32: #{tpu_custom_call.1} parent=1 // pred_region
      %98 = vsyncadd [#allocation12], 0
      %s99 = sshll.u32 %s7, 4
      %s100 = int_to_ptr.hbm [resolvable:$true] %s99
      %s101 = sshll.u32 [#allocation11], 4
      %s102 = int_to_ptr.vmem [resolvable:$true] %s101
      %107 = dma.hbm_to_vmem [thread:$0]  %s100, 256, %s102, [#allocation12], 128, 128, 8
    $region33: #{tpu_custom_call.1} parent=1 // pred_fallthru
      _
    // Predicated region
    $region34: #{tpu_custom_call.1} parent=1 // pred_check
      _
    $region35: #{tpu_custom_call.1} parent=1 // pred_check_branch
      %109 = sbr.rel (0) target = $region37
    $region36: #{tpu_custom_call.1} parent=1 // pred_region
      %111 = vsyncadd [#allocation12], 0
      %s112 = sshll.u32 %s8, 4
      %s113 = int_to_ptr.hbm [resolvable:$true] %s112
      %s114 = sshll.u32 [#allocation13], 4
      %s115 = int_to_ptr.vmem [resolvable:$true] %s114
      %120 = dma.hbm_to_vmem [thread:$0]  %s113, 256, %s115, [#allocation12], 128, 128, 8
    $region37: #{tpu_custom_call.1} parent=1 // pred_fallthru
      _
    // Predicated region
    $region38: #{tpu_custom_call.1} parent=1 // pred_check
      _
    $region39: #{tpu_custom_call.1} parent=1 // pred_check_branch
      %122 = sbr.rel (0) target = $region41
    $region40: #{tpu_custom_call.1} parent=1 // pred_region
      %124 = vsyncadd [#allocation15], 0
      %s125 = sshll.u32 %s9, 4
      %s126 = int_to_ptr.hbm [resolvable:$true] %s125
      %s127 = sshll.u32 [#allocation14], 4
      %s128 = int_to_ptr.vmem [resolvable:$true] %s127
      %133 = dma.hbm_to_vmem [thread:$0]  %s126, 512, %s128, [#allocation15], 128, 128, 8
    $region41: #{tpu_custom_call.1} parent=1 // pred_fallthru
      _
    // Predicated region
    $region42: #{tpu_custom_call.1} parent=1 // pred_check
      _
    $region43: #{tpu_custom_call.1} parent=1 // pred_check_branch
      %135 = sbr.rel (0) target = $region45
    $region44: #{tpu_custom_call.1} parent=1 // pred_region
      _
    $region45: #{tpu_custom_call.1} parent=1 // pred_fallthru
      _
    // Predicated region
    $region46: #{tpu_custom_call.1} parent=1 // pred_check
      _
    $region47: #{tpu_custom_call.1} parent=1 // pred_check_branch
      %137 = sbr.rel (0) target = $region49
    $region48: #{tpu_custom_call.1} parent=1 // pred_region
      %139 = vsyncadd [#allocation15], 0
      %s140 = sshll.u32 %s11, 4
      %s141 = int_to_ptr.hbm [resolvable:$true] %s140
      %s142 = sshll.u32 [#allocation16], 4
      %s143 = int_to_ptr.vmem [resolvable:$true] %s142
      %148 = dma.hbm_to_vmem [thread:$0]  %s141, 512, %s143, [#allocation15], 128, 128, 8
    $region49: #{tpu_custom_call.1} parent=1 // pred_fallthru
      _
    // Predicated region
    $region50: #{tpu_custom_call.1} parent=1 // pred_check
      _
    $region51: #{tpu_custom_call.1} parent=1 // pred_check_branch
      %150 = sbr.rel (0) target = $region53
    $region52: #{tpu_custom_call.1} parent=1 // pred_region
      _
    $region53: #{tpu_custom_call.1} parent=1 // pred_fallthru
      _
    // Predicated region
    $region54: #{tpu_custom_call.1} parent=1 // pred_check
      _
    $region55: #{tpu_custom_call.1} parent=1 // pred_check_branch
      %152 = sbr.rel (0) target = $region57
    $region56: #{tpu_custom_call.1} parent=1 // pred_region
      %154 = dma.done [#allocation3], 128
    $region57: #{tpu_custom_call.1} parent=1 // pred_fallthru
      _
    // Predicated region
    $region58: #{tpu_custom_call.1} parent=1 // pred_check
      _
    $region59: #{tpu_custom_call.1} parent=1 // pred_check_branch
      %156 = sbr.rel (0) target = $region61
    $region60: #{tpu_custom_call.1} parent=1 // pred_region
      %158 = dma.done [#allocation6], 256
    $region61: #{tpu_custom_call.1} parent=1 // pred_fallthru
      _
    // Predicated region
    $region62: #{tpu_custom_call.1} parent=1 // pred_check
      _
    $region63: #{tpu_custom_call.1} parent=1 // pred_check_branch
      %160 = sbr.rel (0) target = $region65
    $region64: #{tpu_custom_call.1} parent=1 // pred_region
      %162 = dma.done [#allocation6], 512
    $region65: #{tpu_custom_call.1} parent=1 // pred_fallthru
      _
    // Predicated region
    $region66: #{tpu_custom_call.1} parent=1 // pred_check
      _
    $region67: #{tpu_custom_call.1} parent=1 // pred_check_branch
      %164 = sbr.rel (0) target = $region69
    $region68: #{tpu_custom_call.1} parent=1 // pred_region
      %166 = dma.done [#allocation9], 512
    $region69: #{tpu_custom_call.1} parent=1 // pred_fallthru
      _
    // Predicated region
    $region70: #{tpu_custom_call.1} parent=1 // pred_check
      _
    $region71: #{tpu_custom_call.1} parent=1 // pred_check_branch
      %168 = sbr.rel (0) target = $region73
    $region72: #{tpu_custom_call.1} parent=1 // pred_region
      %170 = dma.done [#allocation9], 512
    $region73: #{tpu_custom_call.1} parent=1 // pred_fallthru
      _
    // Predicated region
    $region74: #{tpu_custom_call.1} parent=1 // pred_check
      _
    $region75: #{tpu_custom_call.1} parent=1 // pred_check_branch
      %172 = sbr.rel (0) target = $region77
    $region76: #{tpu_custom_call.1} parent=1 // pred_region
      %174 = dma.done [#allocation12], 256
    $region77: #{tpu_custom_call.1} parent=1 // pred_fallthru
      _
    // Predicated region
    $region78: #{tpu_custom_call.1} parent=1 // pred_check
      _
    $region79: #{tpu_custom_call.1} parent=1 // pred_check_branch
      %176 = sbr.rel (0) target = $region81
    $region80: #{tpu_custom_call.1} parent=1 // pred_region
      %178 = dma.done [#allocation12], 256
    $region81: #{tpu_custom_call.1} parent=1 // pred_fallthru
      _
    // Predicated region
    $region82: #{tpu_custom_call.1} parent=1 // pred_check
      _
    $region83: #{tpu_custom_call.1} parent=1 // pred_check_branch
      %180 = sbr.rel (0) target = $region85
    $region84: #{tpu_custom_call.1} parent=1 // pred_region
      %182 = dma.done [#allocation15], 512
    $region85: #{tpu_custom_call.1} parent=1 // pred_fallthru
      _
    // Predicated region
    $region86: #{tpu_custom_call.1} parent=1 // pred_check
      _
    $region87: #{tpu_custom_call.1} parent=1 // pred_check_branch
      %184 = sbr.rel (0) target = $region89
    $region88: #{tpu_custom_call.1} parent=1 // pred_region
      %186 = dma.done [#allocation15], 512
    $region89: #{tpu_custom_call.1} parent=1 // pred_fallthru
      _
    %v187 = vld [vmem:[#allocation5] sm:$0xff]
    %v188 = vld [vmem:[#allocation5 + $0x8] sm:$0xff]
    %v189 = vld [vmem:[#allocation7] sm:$0xff]
    %v190 = vld [vmem:[#allocation7 + $0x8] sm:$0xff]
    %v191 = vld [vmem:[#allocation7 + $0x10] sm:$0xff]
    %v192 = vld [vmem:[#allocation7 + $0x18] sm:$0xff]
    %v193 = vld [vmem:[%s3] sm:$0x1]
    %v194 = vld [vmem:[#allocation11] sm:$0xff]
    %v195 = vld [vmem:[#allocation13] sm:$0xff]
    %v196 = vld [vmem:[#allocation2] sm:$0xff]
    %v198 = vperm.slane %v193, 0
    %vm200 = vcmask 130048
    %v202 = vsel %vm200, %v196, 0
    %204 = vmatpush.msra.mxu0 0.0
    %205 = vmatpush.msra.mxu0 0.0
    %206 = vmatpush.msra.mxu0 0.0
    %207 = vmatpush.msra.mxu0 0.0
    %208 = vmatpush.msra.mxu0 0.0
    %209 = vmatpush.msra.mxu0 0.0
    %210 = vmatpush.msra.mxu0 0.0
    %211 = vmatpush.msra.mxu0 0.0
    %212 = vmatpush.msra.mxu0 0.0
    %213 = vmatpush.msra.mxu0 0.0
    %214 = vmatpush.msra.mxu0 0.0
    %215 = vmatpush.msra.mxu0 0.0
    %216 = vmatpush.msra.mxu0 0.0
    %217 = vmatpush.msra.mxu0 0.0
    %218 = vmatpush.msra.mxu0 %v188
    %219 = vmatpush.msra.mxu0 %v187
    %220 = vmatmul.f32.gmra.mxu0 %v202
    %v221 = vpop.f32.mrf.mxu0
    %v222 = vadd.f32 %v198, %v221
    %223 = vdwg.mxu0
    %vm224 = vcmask 261120
    %v226 = vsel %vm224, %v194, 0
    %228 = vmatpush.msra.mxu0 0.0
    %229 = vmatpush.msra.mxu0 0.0
    %230 = vmatpush.msra.mxu0 0.0
    %231 = vmatpush.msra.mxu0 0.0
    %232 = vmatpush.msra.mxu0 0.0
    %233 = vmatpush.msra.mxu0 0.0
    %234 = vmatpush.msra.mxu0 0.0
    %235 = vmatpush.msra.mxu0 0.0
    %236 = vmatpush.msra.mxu0 0.0
    %237 = vmatpush.msra.mxu0 0.0
    %238 = vmatpush.msra.mxu0 0.0
    %239 = vmatpush.msra.mxu0 0.0
    %240 = vmatpush.msra.mxu0 %v192
    %241 = vmatpush.msra.mxu0 %v191
    %242 = vmatpush.msra.mxu0 %v190
    %243 = vmatpush.msra.mxu0 %v189
    %244 = vmatmul.f32.gmra.mxu0 %v226
    %v245 = vpop.f32.mrf.mxu0
    %v246 = vadd.f32 0.0, %v245
    %247 = vdwg.mxu0
    %v248 = vadd.f32 %v222, %v246
    %v249 = vxor.u32 %v248, 2147483648
    %v250 = vmul.f32 %v249, 1.442695
    %v251 = vpow.pop %v250
    %v252 = vadd.f32 %v251, 1.0
    %v253 = vrcp.pop %v252
    %v254 = vmul.f32 %v252, %v253
    %v255 = vsub.f32 1.0, %v254
    %v256 = vmul.f32 %v253, %v255
    %v257 = vadd.f32 %v253, %v256
    %vm258 = vweird.f32 %v252
    %vm259 = vweird.f32 %v253
    %vm260 = vmor %vm258, %vm259
    %v261 = vsel %vm260, %v253, %v257
    %v262 = vand.u32 2147483647, %v252
    %vm263 = vcmp.eq.f32.partialorder %v262, 8.507059e+37
    %v264 = vand.u32 %v252, 2147483648
    %v265 = vor.u32 1.1754944e-38, %v264
    %v266 = vsel %vm263, %v265, %v261
    %v267 = vmul.f32 1.0, %v266
    %v268 = vtanh.pop %v248
    %270 = vrot.lane.b32.xlu0 %v195, 32
    %v271 = vpop.permute.xlu0 %270
    %v273 = vmul.f32 %v267, %v271
    %275 = vrot.lane.b32.xlu0 %v268, 64
    %v276 = vpop.permute.xlu0 %275
    %v278 = vmul.f32 %v267, %v276
    %280 = vrot.lane.b32.xlu0 %v278, 32
    %v281 = vpop.permute.xlu0 %280
    %v283 = vadd.f32 %v273, %v281
    %v284 = vtanh.pop %v283
    %286 = vrot.lane.b32.xlu0 %v284, 64
    %v287 = vpop.permute.xlu0 %286
    %v289 = vmul.f32 %v267, %v287
    %290 = vrot.lane.b32.xlu0 %v196, 112
    %v291 = vpop.permute.xlu0 %290
    %v292 = vsel %vm200, %v291, 0
    %294 = vmatpush.msra.mxu0 0.0
    %295 = vmatpush.msra.mxu0 0.0
    %296 = vmatpush.msra.mxu0 0.0
    %297 = vmatpush.msra.mxu0 0.0
    %298 = vmatpush.msra.mxu0 0.0
    %299 = vmatpush.msra.mxu0 0.0
    %300 = vmatpush.msra.mxu0 0.0
    %301 = vmatpush.msra.mxu0 0.0
    %302 = vmatpush.msra.mxu0 0.0
    %303 = vmatpush.msra.mxu0 0.0
    %304 = vmatpush.msra.mxu0 0.0
    %305 = vmatpush.msra.mxu0 0.0
    %306 = vmatpush.msra.mxu0 0.0
    %307 = vmatpush.msra.mxu0 0.0
    %308 = vmatpush.msra.mxu0 %v188
    %309 = vmatpush.msra.mxu0 %v187
    %310 = vmatmul.f32.gmra.mxu0 %v292
    %v311 = vpop.f32.mrf.mxu0
    %v312 = vadd.f32 %v198, %v311
    %313 = vdwg.mxu0
    %315 = vrot.lane.b32.xlu0 %v289, 32
    %v316 = vpop.permute.xlu0 %315
    %v317 = vsel %vm224, %v316, 0
    %319 = vmatpush.msra.mxu0 0.0
    %320 = vmatpush.msra.mxu0 0.0
    %321 = vmatpush.msra.mxu0 0.0
    %322 = vmatpush.msra.mxu0 0.0
    %323 = vmatpush.msra.mxu0 0.0
    %324 = vmatpush.msra.mxu0 0.0
    %325 = vmatpush.msra.mxu0 0.0
    %326 = vmatpush.msra.mxu0 0.0
    %327 = vmatpush.msra.mxu0 0.0
    %328 = vmatpush.msra.mxu0 0.0
    %329 = vmatpush.msra.mxu0 0.0
    %330 = vmatpush.msra.mxu0 0.0
    %331 = vmatpush.msra.mxu0 %v192
    %332 = vmatpush.msra.mxu0 %v191
    %333 = vmatpush.msra.mxu0 %v190
    %334 = vmatpush.msra.mxu0 %v189
    %335 = vmatmul.f32.gmra.mxu0 %v317
    %v336 = vpop.f32.mrf.mxu0
    %v337 = vadd.f32 0.0, %v336
    %338 = vdwg.mxu0
    %v339 = vadd.f32 %v312, %v337
    %v340 = vxor.u32 %v339, 2147483648
    %v341 = vmul.f32 %v340, 1.442695
    %v342 = vpow.pop %v341
    %v343 = vadd.f32 %v342, 1.0
    %v344 = vrcp.pop %v343
    %v345 = vmul.f32 %v343, %v344
    %v346 = vsub.f32 1.0, %v345
    %v347 = vmul.f32 %v344, %v346
    %v348 = vadd.f32 %v344, %v347
    %vm349 = vweird.f32 %v343
    %vm350 = vweird.f32 %v344
    %vm351 = vmor %vm349, %vm350
    %v352 = vsel %vm351, %v344, %v348
    %v353 = vand.u32 2147483647, %v343
    %vm354 = vcmp.eq.f32.partialorder %v353, 8.507059e+37
    %v355 = vand.u32 %v343, 2147483648
    %v356 = vor.u32 1.1754944e-38, %v355
    %v357 = vsel %vm354, %v356, %v352
    %v358 = vmul.f32 1.0, %v357
    %v359 = vtanh.pop %v339
    %v360 = vmul.f32 %v358, %v283
    %362 = vrot.lane.b32.xlu0 %v359, 64
    %v363 = vpop.permute.xlu0 %362
    %v365 = vmul.f32 %v358, %v363
    %367 = vrot.lane.b32.xlu0 %v365, 32
    %v368 = vpop.permute.xlu0 %367
    %v370 = vadd.f32 %v360, %v368
    %v371 = vtanh.pop %v370
    %373 = vrot.lane.b32.xlu0 %v371, 64
    %v374 = vpop.permute.xlu0 %373
    %v376 = vmul.f32 %v358, %v374
    %377 = vrot.lane.b32.xlu0 %v196, 96
    %v378 = vpop.permute.xlu0 %377
    %v379 = vsel %vm200, %v378, 0
    %381 = vmatpush.msra.mxu0 0.0
    %382 = vmatpush.msra.mxu0 0.0
    %383 = vmatpush.msra.mxu0 0.0
    %384 = vmatpush.msra.mxu0 0.0
    %385 = vmatpush.msra.mxu0 0.0
    %386 = vmatpush.msra.mxu0 0.0
    %387 = vmatpush.msra.mxu0 0.0
    %388 = vmatpush.msra.mxu0 0.0
    %389 = vmatpush.msra.mxu0 0.0
    %390 = vmatpush.msra.mxu0 0.0
    %391 = vmatpush.msra.mxu0 0.0
    %392 = vmatpush.msra.mxu0 0.0
    %393 = vmatpush.msra.mxu0 0.0
    %394 = vmatpush.msra.mxu0 0.0
    %395 = vmatpush.msra.mxu0 %v188
    %396 = vmatpush.msra.mxu0 %v187
    %397 = vmatmul.f32.gmra.mxu0 %v379
    %v398 = vpop.f32.mrf.mxu0
    %v399 = vadd.f32 %v198, %v398
    %400 = vdwg.mxu0
    %402 = vrot.lane.b32.xlu0 %v376, 32
    %v403 = vpop.permute.xlu0 %402
    %v404 = vsel %vm224, %v403, 0
    %406 = vmatpush.msra.mxu0 0.0
    %407 = vmatpush.msra.mxu0 0.0
    %408 = vmatpush.msra.mxu0 0.0
    %409 = vmatpush.msra.mxu0 0.0
    %410 = vmatpush.msra.mxu0 0.0
    %411 = vmatpush.msra.mxu0 0.0
    %412 = vmatpush.msra.mxu0 0.0
    %413 = vmatpush.msra.mxu0 0.0
    %414 = vmatpush.msra.mxu0 0.0
    %415 = vmatpush.msra.mxu0 0.0
    %416 = vmatpush.msra.mxu0 0.0
    %417 = vmatpush.msra.mxu0 0.0
    %418 = vmatpush.msra.mxu0 %v192
    %419 = vmatpush.msra.mxu0 %v191
    %420 = vmatpush.msra.mxu0 %v190
    %421 = vmatpush.msra.mxu0 %v189
    %422 = vmatmul.f32.gmra.mxu0 %v404
    %v423 = vpop.f32.mrf.mxu0
    %v424 = vadd.f32 0.0, %v423
    %425 = vdwg.mxu0
    %v426 = vadd.f32 %v399, %v424
    %v427 = vxor.u32 %v426, 2147483648
    %v428 = vmul.f32 %v427, 1.442695
    %v429 = vpow.pop %v428
    %v430 = vadd.f32 %v429, 1.0
    %v431 = vrcp.pop %v430
    %v432 = vmul.f32 %v430, %v431
    %v433 = vsub.f32 1.0, %v432
    %v434 = vmul.f32 %v431, %v433
    %v435 = vadd.f32 %v431, %v434
    %vm436 = vweird.f32 %v430
    %vm437 = vweird.f32 %v431
    %vm438 = vmor %vm436, %vm437
    %v439 = vsel %vm438, %v431, %v435
    %v440 = vand.u32 2147483647, %v430
    %vm441 = vcmp.eq.f32.partialorder %v440, 8.507059e+37
    %v442 = vand.u32 %v430, 2147483648
    %v443 = vor.u32 1.1754944e-38, %v442
    %v444 = vsel %vm441, %v443, %v439
    %v445 = vmul.f32 1.0, %v444
    %v446 = vtanh.pop %v426
    %v447 = vmul.f32 %v445, %v370
    %449 = vrot.lane.b32.xlu0 %v446, 64
    %v450 = vpop.permute.xlu0 %449
    %v452 = vmul.f32 %v445, %v450
    %454 = vrot.lane.b32.xlu0 %v452, 32
    %v455 = vpop.permute.xlu0 %454
    %v457 = vadd.f32 %v447, %v455
    %v458 = vtanh.pop %v457
    %460 = vrot.lane.b32.xlu0 %v458, 64
    %v461 = vpop.permute.xlu0 %460
    %v463 = vmul.f32 %v445, %v461
    %464 = vrot.lane.b32.xlu0 %v196, 80
    %v465 = vpop.permute.xlu0 %464
    %v466 = vsel %vm200, %v465, 0
    %468 = vmatpush.msra.mxu0 0.0
    %469 = vmatpush.msra.mxu0 0.0
    %470 = vmatpush.msra.mxu0 0.0
    %471 = vmatpush.msra.mxu0 0.0
    %472 = vmatpush.msra.mxu0 0.0
    %473 = vmatpush.msra.mxu0 0.0
    %474 = vmatpush.msra.mxu0 0.0
    %475 = vmatpush.msra.mxu0 0.0
    %476 = vmatpush.msra.mxu0 0.0
    %477 = vmatpush.msra.mxu0 0.0
    %478 = vmatpush.msra.mxu0 0.0
    %479 = vmatpush.msra.mxu0 0.0
    %480 = vmatpush.msra.mxu0 0.0
    %481 = vmatpush.msra.mxu0 0.0
    %482 = vmatpush.msra.mxu0 %v188
    %483 = vmatpush.msra.mxu0 %v187
    %484 = vmatmul.f32.gmra.mxu0 %v466
    %v485 = vpop.f32.mrf.mxu0
    %v486 = vadd.f32 %v198, %v485
    %487 = vdwg.mxu0
    %489 = vrot.lane.b32.xlu0 %v463, 32
    %v490 = vpop.permute.xlu0 %489
    %v491 = vsel %vm224, %v490, 0
    %493 = vmatpush.msra.mxu0 0.0
    %494 = vmatpush.msra.mxu0 0.0
    %495 = vmatpush.msra.mxu0 0.0
    %496 = vmatpush.msra.mxu0 0.0
    %497 = vmatpush.msra.mxu0 0.0
    %498 = vmatpush.msra.mxu0 0.0
    %499 = vmatpush.msra.mxu0 0.0
    %500 = vmatpush.msra.mxu0 0.0
    %501 = vmatpush.msra.mxu0 0.0
    %502 = vmatpush.msra.mxu0 0.0
    %503 = vmatpush.msra.mxu0 0.0
    %504 = vmatpush.msra.mxu0 0.0
    %505 = vmatpush.msra.mxu0 %v192
    %506 = vmatpush.msra.mxu0 %v191
    %507 = vmatpush.msra.mxu0 %v190
    %508 = vmatpush.msra.mxu0 %v189
    %509 = vmatmul.f32.gmra.mxu0 %v491
    %v510 = vpop.f32.mrf.mxu0
    %v511 = vadd.f32 0.0, %v510
    %512 = vdwg.mxu0
    %v513 = vadd.f32 %v486, %v511
    %v514 = vxor.u32 %v513, 2147483648
    %v515 = vmul.f32 %v514, 1.442695
    %v516 = vpow.pop %v515
    %v517 = vadd.f32 %v516, 1.0
    %v518 = vrcp.pop %v517
    %v519 = vmul.f32 %v517, %v518
    %v520 = vsub.f32 1.0, %v519
    %v521 = vmul.f32 %v518, %v520
    %v522 = vadd.f32 %v518, %v521
    %vm523 = vweird.f32 %v517
    %vm524 = vweird.f32 %v518
    %vm525 = vmor %vm523, %vm524
    %v526 = vsel %vm525, %v518, %v522
    %v527 = vand.u32 2147483647, %v517
    %vm528 = vcmp.eq.f32.partialorder %v527, 8.507059e+37
    %v529 = vand.u32 %v517, 2147483648
    %v530 = vor.u32 1.1754944e-38, %v529
    %v531 = vsel %vm528, %v530, %v526
    %v532 = vmul.f32 1.0, %v531
    %v533 = vtanh.pop %v513
    %v534 = vmul.f32 %v532, %v457
    %536 = vrot.lane.b32.xlu0 %v533, 64
    %v537 = vpop.permute.xlu0 %536
    %v539 = vmul.f32 %v532, %v537
    %541 = vrot.lane.b32.xlu0 %v539, 32
    %v542 = vpop.permute.xlu0 %541
    %v544 = vadd.f32 %v534, %v542
    %v545 = vtanh.pop %v544
    %547 = vrot.lane.b32.xlu0 %v545, 64
    %v548 = vpop.permute.xlu0 %547
    %v550 = vmul.f32 %v532, %v548
    %551 = vrot.lane.b32.xlu0 %v196, 64
    %v552 = vpop.permute.xlu0 %551
    %v553 = vsel %vm200, %v552, 0
    %555 = vmatpush.msra.mxu0 0.0
    %556 = vmatpush.msra.mxu0 0.0
    %557 = vmatpush.msra.mxu0 0.0
    %558 = vmatpush.msra.mxu0 0.0
    %559 = vmatpush.msra.mxu0 0.0
    %560 = vmatpush.msra.mxu0 0.0
    %561 = vmatpush.msra.mxu0 0.0
    %562 = vmatpush.msra.mxu0 0.0
    %563 = vmatpush.msra.mxu0 0.0
    %564 = vmatpush.msra.mxu0 0.0
    %565 = vmatpush.msra.mxu0 0.0
    %566 = vmatpush.msra.mxu0 0.0
    %567 = vmatpush.msra.mxu0 0.0
    %568 = vmatpush.msra.mxu0 0.0
    %569 = vmatpush.msra.mxu0 %v188
    %570 = vmatpush.msra.mxu0 %v187
    %571 = vmatmul.f32.gmra.mxu0 %v553
    %v572 = vpop.f32.mrf.mxu0
    %v573 = vadd.f32 %v198, %v572
    %574 = vdwg.mxu0
    %576 = vrot.lane.b32.xlu0 %v550, 32
    %v577 = vpop.permute.xlu0 %576
    %v578 = vsel %vm224, %v577, 0
    %580 = vmatpush.msra.mxu0 0.0
    %581 = vmatpush.msra.mxu0 0.0
    %582 = vmatpush.msra.mxu0 0.0
    %583 = vmatpush.msra.mxu0 0.0
    %584 = vmatpush.msra.mxu0 0.0
    %585 = vmatpush.msra.mxu0 0.0
    %586 = vmatpush.msra.mxu0 0.0
    %587 = vmatpush.msra.mxu0 0.0
    %588 = vmatpush.msra.mxu0 0.0
    %589 = vmatpush.msra.mxu0 0.0
    %590 = vmatpush.msra.mxu0 0.0
    %591 = vmatpush.msra.mxu0 0.0
    %592 = vmatpush.msra.mxu0 %v192
    %593 = vmatpush.msra.mxu0 %v191
    %594 = vmatpush.msra.mxu0 %v190
    %595 = vmatpush.msra.mxu0 %v189
    %596 = vmatmul.f32.gmra.mxu0 %v578
    %v597 = vpop.f32.mrf.mxu0
    %v598 = vadd.f32 0.0, %v597
    %599 = vdwg.mxu0
    %v600 = vadd.f32 %v573, %v598
    %v601 = vxor.u32 %v600, 2147483648
    %v602 = vmul.f32 %v601, 1.442695
    %v603 = vpow.pop %v602
    %v604 = vadd.f32 %v603, 1.0
    %v605 = vrcp.pop %v604
    %v606 = vmul.f32 %v604, %v605
    %v607 = vsub.f32 1.0, %v606
    %v608 = vmul.f32 %v605, %v607
    %v609 = vadd.f32 %v605, %v608
    %vm610 = vweird.f32 %v604
    %vm611 = vweird.f32 %v605
    %vm612 = vmor %vm610, %vm611
    %v613 = vsel %vm612, %v605, %v609
    %v614 = vand.u32 2147483647, %v604
    %vm615 = vcmp.eq.f32.partialorder %v614, 8.507059e+37
    %v616 = vand.u32 %v604, 2147483648
    %v617 = vor.u32 1.1754944e-38, %v616
    %v618 = vsel %vm615, %v617, %v613
    %v619 = vmul.f32 1.0, %v618
    %v620 = vtanh.pop %v600
    %v621 = vmul.f32 %v619, %v544
    %623 = vrot.lane.b32.xlu0 %v620, 64
    %v624 = vpop.permute.xlu0 %623
    %v626 = vmul.f32 %v619, %v624
    %628 = vrot.lane.b32.xlu0 %v626, 32
    %v629 = vpop.permute.xlu0 %628
    %v631 = vadd.f32 %v621, %v629
    %v632 = vtanh.pop %v631
    %634 = vrot.lane.b32.xlu0 %v632, 64
    %v635 = vpop.permute.xlu0 %634
    %v637 = vmul.f32 %v619, %v635
    %638 = vrot.lane.b32.xlu0 %v196, 48
    %v639 = vpop.permute.xlu0 %638
    %v640 = vsel %vm200, %v639, 0
    %642 = vmatpush.msra.mxu0 0.0
    %643 = vmatpush.msra.mxu0 0.0
    %644 = vmatpush.msra.mxu0 0.0
    %645 = vmatpush.msra.mxu0 0.0
    %646 = vmatpush.msra.mxu0 0.0
    %647 = vmatpush.msra.mxu0 0.0
    %648 = vmatpush.msra.mxu0 0.0
    %649 = vmatpush.msra.mxu0 0.0
    %650 = vmatpush.msra.mxu0 0.0
    %651 = vmatpush.msra.mxu0 0.0
    %652 = vmatpush.msra.mxu0 0.0
    %653 = vmatpush.msra.mxu0 0.0
    %654 = vmatpush.msra.mxu0 0.0
    %655 = vmatpush.msra.mxu0 0.0
    %656 = vmatpush.msra.mxu0 %v188
    %657 = vmatpush.msra.mxu0 %v187
    %658 = vmatmul.f32.gmra.mxu0 %v640
    %v659 = vpop.f32.mrf.mxu0
    %v660 = vadd.f32 %v198, %v659
    %661 = vdwg.mxu0
    %663 = vrot.lane.b32.xlu0 %v637, 32
    %v664 = vpop.permute.xlu0 %663
    %v665 = vsel %vm224, %v664, 0
    %667 = vmatpush.msra.mxu0 0.0
    %668 = vmatpush.msra.mxu0 0.0
    %669 = vmatpush.msra.mxu0 0.0
    %670 = vmatpush.msra.mxu0 0.0
    %671 = vmatpush.msra.mxu0 0.0
    %672 = vmatpush.msra.mxu0 0.0
    %673 = vmatpush.msra.mxu0 0.0
    %674 = vmatpush.msra.mxu0 0.0
    %675 = vmatpush.msra.mxu0 0.0
    %676 = vmatpush.msra.mxu0 0.0
    %677 = vmatpush.msra.mxu0 0.0
    %678 = vmatpush.msra.mxu0 0.0
    %679 = vmatpush.msra.mxu0 %v192
    %680 = vmatpush.msra.mxu0 %v191
    %681 = vmatpush.msra.mxu0 %v190
    %682 = vmatpush.msra.mxu0 %v189
    %683 = vmatmul.f32.gmra.mxu0 %v665
    %v684 = vpop.f32.mrf.mxu0
    %v685 = vadd.f32 0.0, %v684
    %686 = vdwg.mxu0
    %v687 = vadd.f32 %v660, %v685
    %v688 = vxor.u32 %v687, 2147483648
    %v689 = vmul.f32 %v688, 1.442695
    %v690 = vpow.pop %v689
    %v691 = vadd.f32 %v690, 1.0
    %v692 = vrcp.pop %v691
    %v693 = vmul.f32 %v691, %v692
    %v694 = vsub.f32 1.0, %v693
    %v695 = vmul.f32 %v692, %v694
    %v696 = vadd.f32 %v692, %v695
    %vm697 = vweird.f32 %v691
    %vm698 = vweird.f32 %v692
    %vm699 = vmor %vm697, %vm698
    %v700 = vsel %vm699, %v692, %v696
    %v701 = vand.u32 2147483647, %v691
    %vm702 = vcmp.eq.f32.partialorder %v701, 8.507059e+37
    %v703 = vand.u32 %v691, 2147483648
    %v704 = vor.u32 1.1754944e-38, %v703
    %v705 = vsel %vm702, %v704, %v700
    %v706 = vmul.f32 1.0, %v705
    %v707 = vtanh.pop %v687
    %v708 = vmul.f32 %v706, %v631
    %710 = vrot.lane.b32.xlu0 %v707, 64
    %v711 = vpop.permute.xlu0 %710
    %v713 = vmul.f32 %v706, %v711
    %715 = vrot.lane.b32.xlu0 %v713, 32
    %v716 = vpop.permute.xlu0 %715
    %v718 = vadd.f32 %v708, %v716
    %v719 = vtanh.pop %v718
    %721 = vrot.lane.b32.xlu0 %v719, 64
    %v722 = vpop.permute.xlu0 %721
    %v724 = vmul.f32 %v706, %v722
    %725 = vrot.lane.b32.xlu0 %v196, 32
    %v726 = vpop.permute.xlu0 %725
    %v727 = vsel %vm200, %v726, 0
    %729 = vmatpush.msra.mxu0 0.0
    %730 = vmatpush.msra.mxu0 0.0
    %731 = vmatpush.msra.mxu0 0.0
    %732 = vmatpush.msra.mxu0 0.0
    %733 = vmatpush.msra.mxu0 0.0
    %734 = vmatpush.msra.mxu0 0.0
    %735 = vmatpush.msra.mxu0 0.0
    %736 = vmatpush.msra.mxu0 0.0
    %737 = vmatpush.msra.mxu0 0.0
    %738 = vmatpush.msra.mxu0 0.0
    %739 = vmatpush.msra.mxu0 0.0
    %740 = vmatpush.msra.mxu0 0.0
    %741 = vmatpush.msra.mxu0 0.0
    %742 = vmatpush.msra.mxu0 0.0
    %743 = vmatpush.msra.mxu0 %v188
    %744 = vmatpush.msra.mxu0 %v187
    %745 = vmatmul.f32.gmra.mxu0 %v727
    %v746 = vpop.f32.mrf.mxu0
    %v747 = vadd.f32 %v198, %v746
    %748 = vdwg.mxu0
    %750 = vrot.lane.b32.xlu0 %v724, 32
    %v751 = vpop.permute.xlu0 %750
    %v752 = vsel %vm224, %v751, 0
    %754 = vmatpush.msra.mxu0 0.0
    %755 = vmatpush.msra.mxu0 0.0
    %756 = vmatpush.msra.mxu0 0.0
    %757 = vmatpush.msra.mxu0 0.0
    %758 = vmatpush.msra.mxu0 0.0
    %759 = vmatpush.msra.mxu0 0.0
    %760 = vmatpush.msra.mxu0 0.0
    %761 = vmatpush.msra.mxu0 0.0
    %762 = vmatpush.msra.mxu0 0.0
    %763 = vmatpush.msra.mxu0 0.0
    %764 = vmatpush.msra.mxu0 0.0
    %765 = vmatpush.msra.mxu0 0.0
    %766 = vmatpush.msra.mxu0 %v192
    %767 = vmatpush.msra.mxu0 %v191
    %768 = vmatpush.msra.mxu0 %v190
    %769 = vmatpush.msra.mxu0 %v189
    %770 = vmatmul.f32.gmra.mxu0 %v752
    %v771 = vpop.f32.mrf.mxu0
    %v772 = vadd.f32 0.0, %v771
    %773 = vdwg.mxu0
    %v774 = vadd.f32 %v747, %v772
    %v775 = vxor.u32 %v774, 2147483648
    %v776 = vmul.f32 %v775, 1.442695
    %v777 = vpow.pop %v776
    %v778 = vadd.f32 %v777, 1.0
    %v779 = vrcp.pop %v778
    %v780 = vmul.f32 %v778, %v779
    %v781 = vsub.f32 1.0, %v780
    %v782 = vmul.f32 %v779, %v781
    %v783 = vadd.f32 %v779, %v782
    %vm784 = vweird.f32 %v778
    %vm785 = vweird.f32 %v779
    %vm786 = vmor %vm784, %vm785
    %v787 = vsel %vm786, %v779, %v783
    %v788 = vand.u32 2147483647, %v778
    %vm789 = vcmp.eq.f32.partialorder %v788, 8.507059e+37
    %v790 = vand.u32 %v778, 2147483648
    %v791 = vor.u32 1.1754944e-38, %v790
    %v792 = vsel %vm789, %v791, %v787
    %v793 = vmul.f32 1.0, %v792
    %v794 = vtanh.pop %v774
    %v795 = vmul.f32 %v793, %v718
    %797 = vrot.lane.b32.xlu0 %v794, 64
    %v798 = vpop.permute.xlu0 %797
    %v800 = vmul.f32 %v793, %v798
    %802 = vrot.lane.b32.xlu0 %v800, 32
    %v803 = vpop.permute.xlu0 %802
    %v805 = vadd.f32 %v795, %v803
    %v806 = vtanh.pop %v805
    %808 = vrot.lane.b32.xlu0 %v806, 64
    %v809 = vpop.permute.xlu0 %808
    %v811 = vmul.f32 %v793, %v809
    %812 = vrot.lane.b32.xlu0 %v196, 16
    %v813 = vpop.permute.xlu0 %812
    %v814 = vsel %vm200, %v813, 0
    %816 = vmatpush.msra.mxu0 0.0
    %817 = vmatpush.msra.mxu0 0.0
    %818 = vmatpush.msra.mxu0 0.0
    %819 = vmatpush.msra.mxu0 0.0
    %820 = vmatpush.msra.mxu0 0.0
    %821 = vmatpush.msra.mxu0 0.0
    %822 = vmatpush.msra.mxu0 0.0
    %823 = vmatpush.msra.mxu0 0.0
    %824 = vmatpush.msra.mxu0 0.0
    %825 = vmatpush.msra.mxu0 0.0
    %826 = vmatpush.msra.mxu0 0.0
    %827 = vmatpush.msra.mxu0 0.0
    %828 = vmatpush.msra.mxu0 0.0
    %829 = vmatpush.msra.mxu0 0.0
    %830 = vmatpush.msra.mxu0 %v188
    %831 = vmatpush.msra.mxu0 %v187
    %832 = vmatmul.f32.gmra.mxu0 %v814
    %v833 = vpop.f32.mrf.mxu0
    %v834 = vadd.f32 %v198, %v833
    %835 = vdwg.mxu0
    %837 = vrot.lane.b32.xlu0 %v811, 32
    %v838 = vpop.permute.xlu0 %837
    %v839 = vsel %vm224, %v838, 0
    %841 = vmatpush.msra.mxu0 0.0
    %842 = vmatpush.msra.mxu0 0.0
    %843 = vmatpush.msra.mxu0 0.0
    %844 = vmatpush.msra.mxu0 0.0
    %845 = vmatpush.msra.mxu0 0.0
    %846 = vmatpush.msra.mxu0 0.0
    %847 = vmatpush.msra.mxu0 0.0
    %848 = vmatpush.msra.mxu0 0.0
    %849 = vmatpush.msra.mxu0 0.0
    %850 = vmatpush.msra.mxu0 0.0
    %851 = vmatpush.msra.mxu0 0.0
    %852 = vmatpush.msra.mxu0 0.0
    %853 = vmatpush.msra.mxu0 %v192
    %854 = vmatpush.msra.mxu0 %v191
    %855 = vmatpush.msra.mxu0 %v190
    %856 = vmatpush.msra.mxu0 %v189
    %857 = vmatmul.f32.gmra.mxu0 %v839
    %v858 = vpop.f32.mrf.mxu0
    %v859 = vadd.f32 0.0, %v858
    %860 = vdwg.mxu0
    %v861 = vadd.f32 %v834, %v859
    %v862 = vxor.u32 %v861, 2147483648
    %v863 = vmul.f32 %v862, 1.442695
    %v864 = vpow.pop %v863
    %v865 = vadd.f32 %v864, 1.0
    %v866 = vrcp.pop %v865
    %v867 = vmul.f32 %v865, %v866
    %v868 = vsub.f32 1.0, %v867
    %v869 = vmul.f32 %v866, %v868
    %v870 = vadd.f32 %v866, %v869
    %vm871 = vweird.f32 %v865
    %vm872 = vweird.f32 %v866
    %vm873 = vmor %vm871, %vm872
    %v874 = vsel %vm873, %v866, %v870
    %v875 = vand.u32 2147483647, %v865
    %vm876 = vcmp.eq.f32.partialorder %v875, 8.507059e+37
    %v877 = vand.u32 %v865, 2147483648
    %v878 = vor.u32 1.1754944e-38, %v877
    %v879 = vsel %vm876, %v878, %v874
    %v880 = vmul.f32 1.0, %v879
    %v881 = vtanh.pop %v861
    %v882 = vmul.f32 %v880, %v805
    %884 = vrot.lane.b32.xlu0 %v881, 64
    %v885 = vpop.permute.xlu0 %884
    %v887 = vmul.f32 %v880, %v885
    %889 = vrot.lane.b32.xlu0 %v887, 32
    %v890 = vpop.permute.xlu0 %889
    %v892 = vadd.f32 %v882, %v890
    %v893 = vtanh.pop %v892
    %895 = vrot.lane.b32.xlu0 %v893, 64
    %v896 = vpop.permute.xlu0 %895
    %v898 = vmul.f32 %v880, %v896
    %900 = vrot.lane.b32.xlu0 %v898, 32
    %v901 = vpop.permute.xlu0 %900
    %903 = vst.msk [vmem:[#allocation18] sm:$0xff] %vm224, %v901
    %905 = vrot.lane.b32.xlu0 %v892, 96
    %v906 = vpop.permute.xlu0 %905
    %908 = vst.msk [vmem:[#allocation20] sm:$0xff] %vm224, %v906
    %v909 = vld [vmem:[#allocation8] sm:$0xff]
    %v910 = vld [vmem:[#allocation8 + $0x8] sm:$0xff]
    %v911 = vld [vmem:[#allocation8 + $0x10] sm:$0xff]
    %v912 = vld [vmem:[#allocation8 + $0x18] sm:$0xff]
    %v913 = vld [vmem:[#allocation10] sm:$0xff]
    %v914 = vld [vmem:[#allocation10 + $0x8] sm:$0xff]
    %v915 = vld [vmem:[#allocation10 + $0x10] sm:$0xff]
    %v916 = vld [vmem:[#allocation10 + $0x18] sm:$0xff]
    %v917 = vld [vmem:[%s6] sm:$0x1]
    %s918 = scalar_lea.vmem [#allocation11], 8
    %v919 = vld [vmem:[%s918] sm:$0xff]
    %s920 = scalar_lea.vmem [#allocation13], 8
    %v921 = vld [vmem:[%s920] sm:$0xff]
    %v923 = vperm.slane %v917, 0
    %925 = vmatpush.msra.mxu0 0.0
    %926 = vmatpush.msra.mxu0 0.0
    %927 = vmatpush.msra.mxu0 0.0
    %928 = vmatpush.msra.mxu0 0.0
    %929 = vmatpush.msra.mxu0 0.0
    %930 = vmatpush.msra.mxu0 0.0
    %931 = vmatpush.msra.mxu0 0.0
    %932 = vmatpush.msra.mxu0 0.0
    %933 = vmatpush.msra.mxu0 0.0
    %934 = vmatpush.msra.mxu0 0.0
    %935 = vmatpush.msra.mxu0 0.0
    %936 = vmatpush.msra.mxu0 0.0
    %937 = vmatpush.msra.mxu0 %v912
    %938 = vmatpush.msra.mxu0 %v911
    %939 = vmatpush.msra.mxu0 %v910
    %940 = vmatpush.msra.mxu0 %v909
    %941 = vmatmul.f32.gmra.mxu0 %v317
    %v942 = vpop.f32.mrf.mxu0
    %v943 = vadd.f32 %v923, %v942
    %944 = vdwg.mxu0
    %v946 = vsel %vm224, %v919, 0
    %948 = vmatpush.msra.mxu0 0.0
    %949 = vmatpush.msra.mxu0 0.0
    %950 = vmatpush.msra.mxu0 0.0
    %951 = vmatpush.msra.mxu0 0.0
    %952 = vmatpush.msra.mxu0 0.0
    %953 = vmatpush.msra.mxu0 0.0
    %954 = vmatpush.msra.mxu0 0.0
    %955 = vmatpush.msra.mxu0 0.0
    %956 = vmatpush.msra.mxu0 0.0
    %957 = vmatpush.msra.mxu0 0.0
    %958 = vmatpush.msra.mxu0 0.0
    %959 = vmatpush.msra.mxu0 0.0
    %960 = vmatpush.msra.mxu0 %v916
    %961 = vmatpush.msra.mxu0 %v915
    %962 = vmatpush.msra.mxu0 %v914
    %963 = vmatpush.msra.mxu0 %v913
    %964 = vmatmul.f32.gmra.mxu0 %v946
    %v965 = vpop.f32.mrf.mxu0
    %v966 = vadd.f32 0.0, %v965
    %967 = vdwg.mxu0
    %v968 = vadd.f32 %v943, %v966
    %v969 = vxor.u32 %v968, 2147483648
    %v970 = vmul.f32 %v969, 1.442695
    %v971 = vpow.pop %v970
    %v972 = vadd.f32 %v971, 1.0
    %v973 = vrcp.pop %v972
    %v974 = vmul.f32 %v972, %v973
    %v975 = vsub.f32 1.0, %v974
    %v976 = vmul.f32 %v973, %v975
    %v977 = vadd.f32 %v973, %v976
    %vm978 = vweird.f32 %v972
    %vm979 = vweird.f32 %v973
    %vm980 = vmor %vm978, %vm979
    %v981 = vsel %vm980, %v973, %v977
    %v982 = vand.u32 2147483647, %v972
    %vm983 = vcmp.eq.f32.partialorder %v982, 8.507059e+37
    %v984 = vand.u32 %v972, 2147483648
    %v985 = vor.u32 1.1754944e-38, %v984
    %v986 = vsel %vm983, %v985, %v981
    %v987 = vmul.f32 1.0, %v986
    %v988 = vtanh.pop %v968
    %990 = vrot.lane.b32.xlu0 %v921, 32
    %v991 = vpop.permute.xlu0 %990
    %v993 = vmul.f32 %v987, %v991
    %995 = vrot.lane.b32.xlu0 %v988, 64
    %v996 = vpop.permute.xlu0 %995
    %v998 = vmul.f32 %v987, %v996
    %1000 = vrot.lane.b32.xlu0 %v998, 32
    %v1001 = vpop.permute.xlu0 %1000
    %v1003 = vadd.f32 %v993, %v1001
    %v1004 = vtanh.pop %v1003
    %1006 = vrot.lane.b32.xlu0 %v1004, 64
    %v1007 = vpop.permute.xlu0 %1006
    %v1009 = vmul.f32 %v987, %v1007
    %1010 = vmatpush.msra.mxu0 0.0
    %1011 = vmatpush.msra.mxu0 0.0
    %1012 = vmatpush.msra.mxu0 0.0
    %1013 = vmatpush.msra.mxu0 0.0
    %1014 = vmatpush.msra.mxu0 0.0
    %1015 = vmatpush.msra.mxu0 0.0
    %1016 = vmatpush.msra.mxu0 0.0
    %1017 = vmatpush.msra.mxu0 0.0
    %1018 = vmatpush.msra.mxu0 0.0
    %1019 = vmatpush.msra.mxu0 0.0
    %1020 = vmatpush.msra.mxu0 0.0
    %1021 = vmatpush.msra.mxu0 0.0
    %1022 = vmatpush.msra.mxu0 %v912
    %1023 = vmatpush.msra.mxu0 %v911
    %1024 = vmatpush.msra.mxu0 %v910
    %1025 = vmatpush.msra.mxu0 %v909
    %1026 = vmatmul.f32.gmra.mxu0 %v404
    %v1027 = vpop.f32.mrf.mxu0
    %v1028 = vadd.f32 %v923, %v1027
    %1029 = vdwg.mxu0
    %1031 = vrot.lane.b32.xlu0 %v1009, 32
    %v1032 = vpop.permute.xlu0 %1031
    %v1033 = vsel %vm224, %v1032, 0
    %1035 = vmatpush.msra.mxu0 0.0
    %1036 = vmatpush.msra.mxu0 0.0
    %1037 = vmatpush.msra.mxu0 0.0
    %1038 = vmatpush.msra.mxu0 0.0
    %1039 = vmatpush.msra.mxu0 0.0
    %1040 = vmatpush.msra.mxu0 0.0
    %1041 = vmatpush.msra.mxu0 0.0
    %1042 = vmatpush.msra.mxu0 0.0
    %1043 = vmatpush.msra.mxu0 0.0
    %1044 = vmatpush.msra.mxu0 0.0
    %1045 = vmatpush.msra.mxu0 0.0
    %1046 = vmatpush.msra.mxu0 0.0
    %1047 = vmatpush.msra.mxu0 %v916
    %1048 = vmatpush.msra.mxu0 %v915
    %1049 = vmatpush.msra.mxu0 %v914
    %1050 = vmatpush.msra.mxu0 %v913
    %1051 = vmatmul.f32.gmra.mxu0 %v1033
    %v1052 = vpop.f32.mrf.mxu0
    %v1053 = vadd.f32 0.0, %v1052
    %1054 = vdwg.mxu0
    %v1055 = vadd.f32 %v1028, %v1053
    %v1056 = vxor.u32 %v1055, 2147483648
    %v1057 = vmul.f32 %v1056, 1.442695
    %v1058 = vpow.pop %v1057
    %v1059 = vadd.f32 %v1058, 1.0
    %v1060 = vrcp.pop %v1059
    %v1061 = vmul.f32 %v1059, %v1060
    %v1062 = vsub.f32 1.0, %v1061
    %v1063 = vmul.f32 %v1060, %v1062
    %v1064 = vadd.f32 %v1060, %v1063
    %vm1065 = vweird.f32 %v1059
    %vm1066 = vweird.f32 %v1060
    %vm1067 = vmor %vm1065, %vm1066
    %v1068 = vsel %vm1067, %v1060, %v1064
    %v1069 = vand.u32 2147483647, %v1059
    %vm1070 = vcmp.eq.f32.partialorder %v1069, 8.507059e+37
    %v1071 = vand.u32 %v1059, 2147483648
    %v1072 = vor.u32 1.1754944e-38, %v1071
    %v1073 = vsel %vm1070, %v1072, %v1068
    %v1074 = vmul.f32 1.0, %v1073
    %v1075 = vtanh.pop %v1055
    %v1076 = vmul.f32 %v1074, %v1003
    %1078 = vrot.lane.b32.xlu0 %v1075, 64
    %v1079 = vpop.permute.xlu0 %1078
    %v1081 = vmul.f32 %v1074, %v1079
    %1083 = vrot.lane.b32.xlu0 %v1081, 32
    %v1084 = vpop.permute.xlu0 %1083
    %v1086 = vadd.f32 %v1076, %v1084
    %v1087 = vtanh.pop %v1086
    %1089 = vrot.lane.b32.xlu0 %v1087, 64
    %v1090 = vpop.permute.xlu0 %1089
    %v1092 = vmul.f32 %v1074, %v1090
    %1093 = vmatpush.msra.mxu0 0.0
    %1094 = vmatpush.msra.mxu0 0.0
    %1095 = vmatpush.msra.mxu0 0.0
    %1096 = vmatpush.msra.mxu0 0.0
    %1097 = vmatpush.msra.mxu0 0.0
    %1098 = vmatpush.msra.mxu0 0.0
    %1099 = vmatpush.msra.mxu0 0.0
    %1100 = vmatpush.msra.mxu0 0.0
    %1101 = vmatpush.msra.mxu0 0.0
    %1102 = vmatpush.msra.mxu0 0.0
    %1103 = vmatpush.msra.mxu0 0.0
    %1104 = vmatpush.msra.mxu0 0.0
    %1105 = vmatpush.msra.mxu0 %v912
    %1106 = vmatpush.msra.mxu0 %v911
    %1107 = vmatpush.msra.mxu0 %v910
    %1108 = vmatpush.msra.mxu0 %v909
    %1109 = vmatmul.f32.gmra.mxu0 %v491
    %v1110 = vpop.f32.mrf.mxu0
    %v1111 = vadd.f32 %v923, %v1110
    %1112 = vdwg.mxu0
    %1114 = vrot.lane.b32.xlu0 %v1092, 32
    %v1115 = vpop.permute.xlu0 %1114
    %v1116 = vsel %vm224, %v1115, 0
    %1118 = vmatpush.msra.mxu0 0.0
    %1119 = vmatpush.msra.mxu0 0.0
    %1120 = vmatpush.msra.mxu0 0.0
    %1121 = vmatpush.msra.mxu0 0.0
    %1122 = vmatpush.msra.mxu0 0.0
    %1123 = vmatpush.msra.mxu0 0.0
    %1124 = vmatpush.msra.mxu0 0.0
    %1125 = vmatpush.msra.mxu0 0.0
    %1126 = vmatpush.msra.mxu0 0.0
    %1127 = vmatpush.msra.mxu0 0.0
    %1128 = vmatpush.msra.mxu0 0.0
    %1129 = vmatpush.msra.mxu0 0.0
    %1130 = vmatpush.msra.mxu0 %v916
    %1131 = vmatpush.msra.mxu0 %v915
    %1132 = vmatpush.msra.mxu0 %v914
    %1133 = vmatpush.msra.mxu0 %v913
    %1134 = vmatmul.f32.gmra.mxu0 %v1116
    %v1135 = vpop.f32.mrf.mxu0
    %v1136 = vadd.f32 0.0, %v1135
    %1137 = vdwg.mxu0
    %v1138 = vadd.f32 %v1111, %v1136
    %v1139 = vxor.u32 %v1138, 2147483648
    %v1140 = vmul.f32 %v1139, 1.442695
    %v1141 = vpow.pop %v1140
    %v1142 = vadd.f32 %v1141, 1.0
    %v1143 = vrcp.pop %v1142
    %v1144 = vmul.f32 %v1142, %v1143
    %v1145 = vsub.f32 1.0, %v1144
    %v1146 = vmul.f32 %v1143, %v1145
    %v1147 = vadd.f32 %v1143, %v1146
    %vm1148 = vweird.f32 %v1142
    %vm1149 = vweird.f32 %v1143
    %vm1150 = vmor %vm1148, %vm1149
    %v1151 = vsel %vm1150, %v1143, %v1147
    %v1152 = vand.u32 2147483647, %v1142
    %vm1153 = vcmp.eq.f32.partialorder %v1152, 8.507059e+37
    %v1154 = vand.u32 %v1142, 2147483648
    %v1155 = vor.u32 1.1754944e-38, %v1154
    %v1156 = vsel %vm1153, %v1155, %v1151
    %v1157 = vmul.f32 1.0, %v1156
    %v1158 = vtanh.pop %v1138
    %v1159 = vmul.f32 %v1157, %v1086
    %1161 = vrot.lane.b32.xlu0 %v1158, 64
    %v1162 = vpop.permute.xlu0 %1161
    %v1164 = vmul.f32 %v1157, %v1162
    %1166 = vrot.lane.b32.xlu0 %v1164, 32
    %v1167 = vpop.permute.xlu0 %1166
    %v1169 = vadd.f32 %v1159, %v1167
    %v1170 = vtanh.pop %v1169
    %1172 = vrot.lane.b32.xlu0 %v1170, 64
    %v1173 = vpop.permute.xlu0 %1172
    %v1175 = vmul.f32 %v1157, %v1173
    %1176 = vmatpush.msra.mxu0 0.0
    %1177 = vmatpush.msra.mxu0 0.0
    %1178 = vmatpush.msra.mxu0 0.0
    %1179 = vmatpush.msra.mxu0 0.0
    %1180 = vmatpush.msra.mxu0 0.0
    %1181 = vmatpush.msra.mxu0 0.0
    %1182 = vmatpush.msra.mxu0 0.0
    %1183 = vmatpush.msra.mxu0 0.0
    %1184 = vmatpush.msra.mxu0 0.0
    %1185 = vmatpush.msra.mxu0 0.0
    %1186 = vmatpush.msra.mxu0 0.0
    %1187 = vmatpush.msra.mxu0 0.0
    %1188 = vmatpush.msra.mxu0 %v912
    %1189 = vmatpush.msra.mxu0 %v911
    %1190 = vmatpush.msra.mxu0 %v910
    %1191 = vmatpush.msra.mxu0 %v909
    %1192 = vmatmul.f32.gmra.mxu0 %v578
    %v1193 = vpop.f32.mrf.mxu0
    %v1194 = vadd.f32 %v923, %v1193
    %1195 = vdwg.mxu0
    %1197 = vrot.lane.b32.xlu0 %v1175, 32
    %v1198 = vpop.permute.xlu0 %1197
    %v1199 = vsel %vm224, %v1198, 0
    %1201 = vmatpush.msra.mxu0 0.0
    %1202 = vmatpush.msra.mxu0 0.0
    %1203 = vmatpush.msra.mxu0 0.0
    %1204 = vmatpush.msra.mxu0 0.0
    %1205 = vmatpush.msra.mxu0 0.0
    %1206 = vmatpush.msra.mxu0 0.0
    %1207 = vmatpush.msra.mxu0 0.0
    %1208 = vmatpush.msra.mxu0 0.0
    %1209 = vmatpush.msra.mxu0 0.0
    %1210 = vmatpush.msra.mxu0 0.0
    %1211 = vmatpush.msra.mxu0 0.0
    %1212 = vmatpush.msra.mxu0 0.0
    %1213 = vmatpush.msra.mxu0 %v916
    %1214 = vmatpush.msra.mxu0 %v915
    %1215 = vmatpush.msra.mxu0 %v914
    %1216 = vmatpush.msra.mxu0 %v913
    %1217 = vmatmul.f32.gmra.mxu0 %v1199
    %v1218 = vpop.f32.mrf.mxu0
    %v1219 = vadd.f32 0.0, %v1218
    %1220 = vdwg.mxu0
    %v1221 = vadd.f32 %v1194, %v1219
    %v1222 = vxor.u32 %v1221, 2147483648
    %v1223 = vmul.f32 %v1222, 1.442695
    %v1224 = vpow.pop %v1223
    %v1225 = vadd.f32 %v1224, 1.0
    %v1226 = vrcp.pop %v1225
    %v1227 = vmul.f32 %v1225, %v1226
    %v1228 = vsub.f32 1.0, %v1227
    %v1229 = vmul.f32 %v1226, %v1228
    %v1230 = vadd.f32 %v1226, %v1229
    %vm1231 = vweird.f32 %v1225
    %vm1232 = vweird.f32 %v1226
    %vm1233 = vmor %vm1231, %vm1232
    %v1234 = vsel %vm1233, %v1226, %v1230
    %v1235 = vand.u32 2147483647, %v1225
    %vm1236 = vcmp.eq.f32.partialorder %v1235, 8.507059e+37
    %v1237 = vand.u32 %v1225, 2147483648
    %v1238 = vor.u32 1.1754944e-38, %v1237
    %v1239 = vsel %vm1236, %v1238, %v1234
    %v1240 = vmul.f32 1.0, %v1239
    %v1241 = vtanh.pop %v1221
    %v1242 = vmul.f32 %v1240, %v1169
    %1244 = vrot.lane.b32.xlu0 %v1241, 64
    %v1245 = vpop.permute.xlu0 %1244
    %v1247 = vmul.f32 %v1240, %v1245
    %1249 = vrot.lane.b32.xlu0 %v1247, 32
    %v1250 = vpop.permute.xlu0 %1249
    %v1252 = vadd.f32 %v1242, %v1250
    %v1253 = vtanh.pop %v1252
    %1255 = vrot.lane.b32.xlu0 %v1253, 64
    %v1256 = vpop.permute.xlu0 %1255
    %v1258 = vmul.f32 %v1240, %v1256
    %1259 = vmatpush.msra.mxu0 0.0
    %1260 = vmatpush.msra.mxu0 0.0
    %1261 = vmatpush.msra.mxu0 0.0
    %1262 = vmatpush.msra.mxu0 0.0
    %1263 = vmatpush.msra.mxu0 0.0
    %1264 = vmatpush.msra.mxu0 0.0
    %1265 = vmatpush.msra.mxu0 0.0
    %1266 = vmatpush.msra.mxu0 0.0
    %1267 = vmatpush.msra.mxu0 0.0
    %1268 = vmatpush.msra.mxu0 0.0
    %1269 = vmatpush.msra.mxu0 0.0
    %1270 = vmatpush.msra.mxu0 0.0
    %1271 = vmatpush.msra.mxu0 %v912
    %1272 = vmatpush.msra.mxu0 %v911
    %1273 = vmatpush.msra.mxu0 %v910
    %1274 = vmatpush.msra.mxu0 %v909
    %1275 = vmatmul.f32.gmra.mxu0 %v665
    %v1276 = vpop.f32.mrf.mxu0
    %v1277 = vadd.f32 %v923, %v1276
    %1278 = vdwg.mxu0
    %1280 = vrot.lane.b32.xlu0 %v1258, 32
    %v1281 = vpop.permute.xlu0 %1280
    %v1282 = vsel %vm224, %v1281, 0
    %1284 = vmatpush.msra.mxu0 0.0
    %1285 = vmatpush.msra.mxu0 0.0
    %1286 = vmatpush.msra.mxu0 0.0
    %1287 = vmatpush.msra.mxu0 0.0
    %1288 = vmatpush.msra.mxu0 0.0
    %1289 = vmatpush.msra.mxu0 0.0
    %1290 = vmatpush.msra.mxu0 0.0
    %1291 = vmatpush.msra.mxu0 0.0
    %1292 = vmatpush.msra.mxu0 0.0
    %1293 = vmatpush.msra.mxu0 0.0
    %1294 = vmatpush.msra.mxu0 0.0
    %1295 = vmatpush.msra.mxu0 0.0
    %1296 = vmatpush.msra.mxu0 %v916
    %1297 = vmatpush.msra.mxu0 %v915
    %1298 = vmatpush.msra.mxu0 %v914
    %1299 = vmatpush.msra.mxu0 %v913
    %1300 = vmatmul.f32.gmra.mxu0 %v1282
    %v1301 = vpop.f32.mrf.mxu0
    %v1302 = vadd.f32 0.0, %v1301
    %1303 = vdwg.mxu0
    %v1304 = vadd.f32 %v1277, %v1302
    %v1305 = vxor.u32 %v1304, 2147483648
    %v1306 = vmul.f32 %v1305, 1.442695
    %v1307 = vpow.pop %v1306
    %v1308 = vadd.f32 %v1307, 1.0
    %v1309 = vrcp.pop %v1308
    %v1310 = vmul.f32 %v1308, %v1309
    %v1311 = vsub.f32 1.0, %v1310
    %v1312 = vmul.f32 %v1309, %v1311
    %v1313 = vadd.f32 %v1309, %v1312
    %vm1314 = vweird.f32 %v1308
    %vm1315 = vweird.f32 %v1309
    %vm1316 = vmor %vm1314, %vm1315
    %v1317 = vsel %vm1316, %v1309, %v1313
    %v1318 = vand.u32 2147483647, %v1308
    %vm1319 = vcmp.eq.f32.partialorder %v1318, 8.507059e+37
    %v1320 = vand.u32 %v1308, 2147483648
    %v1321 = vor.u32 1.1754944e-38, %v1320
    %v1322 = vsel %vm1319, %v1321, %v1317
    %v1323 = vmul.f32 1.0, %v1322
    %v1324 = vtanh.pop %v1304
    %v1325 = vmul.f32 %v1323, %v1252
    %1327 = vrot.lane.b32.xlu0 %v1324, 64
    %v1328 = vpop.permute.xlu0 %1327
    %v1330 = vmul.f32 %v1323, %v1328
    %1332 = vrot.lane.b32.xlu0 %v1330, 32
    %v1333 = vpop.permute.xlu0 %1332
    %v1335 = vadd.f32 %v1325, %v1333
    %v1336 = vtanh.pop %v1335
    %1338 = vrot.lane.b32.xlu0 %v1336, 64
    %v1339 = vpop.permute.xlu0 %1338
    %v1341 = vmul.f32 %v1323, %v1339
    %1342 = vmatpush.msra.mxu0 0.0
    %1343 = vmatpush.msra.mxu0 0.0
    %1344 = vmatpush.msra.mxu0 0.0
    %1345 = vmatpush.msra.mxu0 0.0
    %1346 = vmatpush.msra.mxu0 0.0
    %1347 = vmatpush.msra.mxu0 0.0
    %1348 = vmatpush.msra.mxu0 0.0
    %1349 = vmatpush.msra.mxu0 0.0
    %1350 = vmatpush.msra.mxu0 0.0
    %1351 = vmatpush.msra.mxu0 0.0
    %1352 = vmatpush.msra.mxu0 0.0
    %1353 = vmatpush.msra.mxu0 0.0
    %1354 = vmatpush.msra.mxu0 %v912
    %1355 = vmatpush.msra.mxu0 %v911
    %1356 = vmatpush.msra.mxu0 %v910
    %1357 = vmatpush.msra.mxu0 %v909
    %1358 = vmatmul.f32.gmra.mxu0 %v752
    %v1359 = vpop.f32.mrf.mxu0
    %v1360 = vadd.f32 %v923, %v1359
    %1361 = vdwg.mxu0
    %1363 = vrot.lane.b32.xlu0 %v1341, 32
    %v1364 = vpop.permute.xlu0 %1363
    %v1365 = vsel %vm224, %v1364, 0
    %1367 = vmatpush.msra.mxu0 0.0
    %1368 = vmatpush.msra.mxu0 0.0
    %1369 = vmatpush.msra.mxu0 0.0
    %1370 = vmatpush.msra.mxu0 0.0
    %1371 = vmatpush.msra.mxu0 0.0
    %1372 = vmatpush.msra.mxu0 0.0
    %1373 = vmatpush.msra.mxu0 0.0
    %1374 = vmatpush.msra.mxu0 0.0
    %1375 = vmatpush.msra.mxu0 0.0
    %1376 = vmatpush.msra.mxu0 0.0
    %1377 = vmatpush.msra.mxu0 0.0
    %1378 = vmatpush.msra.mxu0 0.0
    %1379 = vmatpush.msra.mxu0 %v916
    %1380 = vmatpush.msra.mxu0 %v915
    %1381 = vmatpush.msra.mxu0 %v914
    %1382 = vmatpush.msra.mxu0 %v913
    %1383 = vmatmul.f32.gmra.mxu0 %v1365
    %v1384 = vpop.f32.mrf.mxu0
    %v1385 = vadd.f32 0.0, %v1384
    %1386 = vdwg.mxu0
    %v1387 = vadd.f32 %v1360, %v1385
    %v1388 = vxor.u32 %v1387, 2147483648
    %v1389 = vmul.f32 %v1388, 1.442695
    %v1390 = vpow.pop %v1389
    %v1391 = vadd.f32 %v1390, 1.0
    %v1392 = vrcp.pop %v1391
    %v1393 = vmul.f32 %v1391, %v1392
    %v1394 = vsub.f32 1.0, %v1393
    %v1395 = vmul.f32 %v1392, %v1394
    %v1396 = vadd.f32 %v1392, %v1395
    %vm1397 = vweird.f32 %v1391
    %vm1398 = vweird.f32 %v1392
    %vm1399 = vmor %vm1397, %vm1398
    %v1400 = vsel %vm1399, %v1392, %v1396
    %v1401 = vand.u32 2147483647, %v1391
    %vm1402 = vcmp.eq.f32.partialorder %v1401, 8.507059e+37
    %v1403 = vand.u32 %v1391, 2147483648
    %v1404 = vor.u32 1.1754944e-38, %v1403
    %v1405 = vsel %vm1402, %v1404, %v1400
    %v1406 = vmul.f32 1.0, %v1405
    %v1407 = vtanh.pop %v1387
    %v1408 = vmul.f32 %v1406, %v1335
    %1410 = vrot.lane.b32.xlu0 %v1407, 64
    %v1411 = vpop.permute.xlu0 %1410
    %v1413 = vmul.f32 %v1406, %v1411
    %1415 = vrot.lane.b32.xlu0 %v1413, 32
    %v1416 = vpop.permute.xlu0 %1415
    %v1418 = vadd.f32 %v1408, %v1416
    %v1419 = vtanh.pop %v1418
    %1421 = vrot.lane.b32.xlu0 %v1419, 64
    %v1422 = vpop.permute.xlu0 %1421
    %v1424 = vmul.f32 %v1406, %v1422
    %1425 = vmatpush.msra.mxu0 0.0
    %1426 = vmatpush.msra.mxu0 0.0
    %1427 = vmatpush.msra.mxu0 0.0
    %1428 = vmatpush.msra.mxu0 0.0
    %1429 = vmatpush.msra.mxu0 0.0
    %1430 = vmatpush.msra.mxu0 0.0
    %1431 = vmatpush.msra.mxu0 0.0
    %1432 = vmatpush.msra.mxu0 0.0
    %1433 = vmatpush.msra.mxu0 0.0
    %1434 = vmatpush.msra.mxu0 0.0
    %1435 = vmatpush.msra.mxu0 0.0
    %1436 = vmatpush.msra.mxu0 0.0
    %1437 = vmatpush.msra.mxu0 %v912
    %1438 = vmatpush.msra.mxu0 %v911
    %1439 = vmatpush.msra.mxu0 %v910
    %1440 = vmatpush.msra.mxu0 %v909
    %1441 = vmatmul.f32.gmra.mxu0 %v839
    %v1442 = vpop.f32.mrf.mxu0
    %v1443 = vadd.f32 %v923, %v1442
    %1444 = vdwg.mxu0
    %1446 = vrot.lane.b32.xlu0 %v1424, 32
    %v1447 = vpop.permute.xlu0 %1446
    %v1448 = vsel %vm224, %v1447, 0
    %1450 = vmatpush.msra.mxu0 0.0
    %1451 = vmatpush.msra.mxu0 0.0
    %1452 = vmatpush.msra.mxu0 0.0
    %1453 = vmatpush.msra.mxu0 0.0
    %1454 = vmatpush.msra.mxu0 0.0
    %1455 = vmatpush.msra.mxu0 0.0
    %1456 = vmatpush.msra.mxu0 0.0
    %1457 = vmatpush.msra.mxu0 0.0
    %1458 = vmatpush.msra.mxu0 0.0
    %1459 = vmatpush.msra.mxu0 0.0
    %1460 = vmatpush.msra.mxu0 0.0
    %1461 = vmatpush.msra.mxu0 0.0
    %1462 = vmatpush.msra.mxu0 %v916
    %1463 = vmatpush.msra.mxu0 %v915
    %1464 = vmatpush.msra.mxu0 %v914
    %1465 = vmatpush.msra.mxu0 %v913
    %1466 = vmatmul.f32.gmra.mxu0 %v1448
    %v1467 = vpop.f32.mrf.mxu0
    %v1468 = vadd.f32 0.0, %v1467
    %1469 = vdwg.mxu0
    %v1470 = vadd.f32 %v1443, %v1468
    %v1471 = vxor.u32 %v1470, 2147483648
    %v1472 = vmul.f32 %v1471, 1.442695
    %v1473 = vpow.pop %v1472
    %v1474 = vadd.f32 %v1473, 1.0
    %v1475 = vrcp.pop %v1474
    %v1476 = vmul.f32 %v1474, %v1475
    %v1477 = vsub.f32 1.0, %v1476
    %v1478 = vmul.f32 %v1475, %v1477
    %v1479 = vadd.f32 %v1475, %v1478
    %vm1480 = vweird.f32 %v1474
    %vm1481 = vweird.f32 %v1475
    %vm1482 = vmor %vm1480, %vm1481
    %v1483 = vsel %vm1482, %v1475, %v1479
    %v1484 = vand.u32 2147483647, %v1474
    %vm1485 = vcmp.eq.f32.partialorder %v1484, 8.507059e+37
    %v1486 = vand.u32 %v1474, 2147483648
    %v1487 = vor.u32 1.1754944e-38, %v1486
    %v1488 = vsel %vm1485, %v1487, %v1483
    %v1489 = vmul.f32 1.0, %v1488
    %v1490 = vtanh.pop %v1470
    %v1491 = vmul.f32 %v1489, %v1418
    %1493 = vrot.lane.b32.xlu0 %v1490, 64
    %v1494 = vpop.permute.xlu0 %1493
    %v1496 = vmul.f32 %v1489, %v1494
    %1498 = vrot.lane.b32.xlu0 %v1496, 32
    %v1499 = vpop.permute.xlu0 %1498
    %v1501 = vadd.f32 %v1491, %v1499
    %v1502 = vtanh.pop %v1501
    %1504 = vrot.lane.b32.xlu0 %v1502, 64
    %v1505 = vpop.permute.xlu0 %1504
    %v1507 = vmul.f32 %v1489, %v1505
    %v1508 = vsel %vm224, %v901, 0
    %1510 = vmatpush.msra.mxu0 0.0
    %1511 = vmatpush.msra.mxu0 0.0
    %1512 = vmatpush.msra.mxu0 0.0
    %1513 = vmatpush.msra.mxu0 0.0
    %1514 = vmatpush.msra.mxu0 0.0
    %1515 = vmatpush.msra.mxu0 0.0
    %1516 = vmatpush.msra.mxu0 0.0
    %1517 = vmatpush.msra.mxu0 0.0
    %1518 = vmatpush.msra.mxu0 0.0
    %1519 = vmatpush.msra.mxu0 0.0
    %1520 = vmatpush.msra.mxu0 0.0
    %1521 = vmatpush.msra.mxu0 0.0
    %1522 = vmatpush.msra.mxu0 %v912
    %1523 = vmatpush.msra.mxu0 %v911
    %1524 = vmatpush.msra.mxu0 %v910
    %1525 = vmatpush.msra.mxu0 %v909
    %1526 = vmatmul.f32.gmra.mxu0 %v1508
    %v1527 = vpop.f32.mrf.mxu0
    %v1528 = vadd.f32 %v923, %v1527
    %1529 = vdwg.mxu0
    %1531 = vrot.lane.b32.xlu0 %v1507, 32
    %v1532 = vpop.permute.xlu0 %1531
    %v1533 = vsel %vm224, %v1532, 0
    %1535 = vmatpush.msra.mxu0 0.0
    %1536 = vmatpush.msra.mxu0 0.0
    %1537 = vmatpush.msra.mxu0 0.0
    %1538 = vmatpush.msra.mxu0 0.0
    %1539 = vmatpush.msra.mxu0 0.0
    %1540 = vmatpush.msra.mxu0 0.0
    %1541 = vmatpush.msra.mxu0 0.0
    %1542 = vmatpush.msra.mxu0 0.0
    %1543 = vmatpush.msra.mxu0 0.0
    %1544 = vmatpush.msra.mxu0 0.0
    %1545 = vmatpush.msra.mxu0 0.0
    %1546 = vmatpush.msra.mxu0 0.0
    %1547 = vmatpush.msra.mxu0 %v916
    %1548 = vmatpush.msra.mxu0 %v915
    %1549 = vmatpush.msra.mxu0 %v914
    %1550 = vmatpush.msra.mxu0 %v913
    %1551 = vmatmul.f32.gmra.mxu0 %v1533
    %v1552 = vpop.f32.mrf.mxu0
    %v1553 = vadd.f32 0.0, %v1552
    %1554 = vdwg.mxu0
    %v1555 = vadd.f32 %v1528, %v1553
    %v1556 = vxor.u32 %v1555, 2147483648
    %v1557 = vmul.f32 %v1556, 1.442695
    %v1558 = vpow.pop %v1557
    %v1559 = vadd.f32 %v1558, 1.0
    %v1560 = vrcp.pop %v1559
    %v1561 = vmul.f32 %v1559, %v1560
    %v1562 = vsub.f32 1.0, %v1561
    %v1563 = vmul.f32 %v1560, %v1562
    %v1564 = vadd.f32 %v1560, %v1563
    %vm1565 = vweird.f32 %v1559
    %vm1566 = vweird.f32 %v1560
    %vm1567 = vmor %vm1565, %vm1566
    %v1568 = vsel %vm1567, %v1560, %v1564
    %v1569 = vand.u32 2147483647, %v1559
    %vm1570 = vcmp.eq.f32.partialorder %v1569, 8.507059e+37
    %v1571 = vand.u32 %v1559, 2147483648
    %v1572 = vor.u32 1.1754944e-38, %v1571
    %v1573 = vsel %vm1570, %v1572, %v1568
    %v1574 = vmul.f32 1.0, %v1573
    %v1575 = vtanh.pop %v1555
    %v1576 = vmul.f32 %v1574, %v1501
    %1578 = vrot.lane.b32.xlu0 %v1575, 64
    %v1579 = vpop.permute.xlu0 %1578
    %v1581 = vmul.f32 %v1574, %v1579
    %1583 = vrot.lane.b32.xlu0 %v1581, 32
    %v1584 = vpop.permute.xlu0 %1583
    %v1586 = vadd.f32 %v1576, %v1584
    %v1587 = vtanh.pop %v1586
    %1589 = vrot.lane.b32.xlu0 %v1587, 64
    %v1590 = vpop.permute.xlu0 %1589
    %v1592 = vmul.f32 %v1574, %v1590
    %1594 = vrot.lane.b32.xlu0 %v1592, 32
    %v1595 = vpop.permute.xlu0 %1594
    %s1597 = scalar_lea.vmem [#allocation18], 8
    %1598 = vst.msk [vmem:[%s1597] sm:$0xff] %vm224, %v1595
    %1600 = vrot.lane.b32.xlu0 %v1586, 96
    %v1601 = vpop.permute.xlu0 %1600
    %s1603 = scalar_lea.vmem [#allocation20], 8
    %1604 = vst.msk [vmem:[%s1603] sm:$0xff] %vm224, %v1601
    %v1605 = vld [vmem:[#allocation14] sm:$0xff]
    %v1606 = vld [vmem:[#allocation14 + $0x8] sm:$0xff]
    %v1607 = vld [vmem:[#allocation14 + $0x10] sm:$0xff]
    %v1608 = vld [vmem:[#allocation14 + $0x18] sm:$0xff]
    %v1609 = vld [vmem:[%s10] sm:$0x1]
    %v1610 = vld [vmem:[#allocation16] sm:$0xff]
    %v1611 = vld [vmem:[#allocation16 + $0x8] sm:$0xff]
    %v1612 = vld [vmem:[#allocation16 + $0x10] sm:$0xff]
    %v1613 = vld [vmem:[#allocation16 + $0x18] sm:$0xff]
    %v1614 = vld [vmem:[%s12] sm:$0x1]
    %v1616 = vperm.slane %v1609, 0
    %1618 = vmatpush.msra.mxu0 0.0
    %1619 = vmatpush.msra.mxu0 0.0
    %1620 = vmatpush.msra.mxu0 0.0
    %1621 = vmatpush.msra.mxu0 0.0
    %1622 = vmatpush.msra.mxu0 0.0
    %1623 = vmatpush.msra.mxu0 0.0
    %1624 = vmatpush.msra.mxu0 0.0
    %1625 = vmatpush.msra.mxu0 0.0
    %1626 = vmatpush.msra.mxu0 0.0
    %1627 = vmatpush.msra.mxu0 0.0
    %1628 = vmatpush.msra.mxu0 0.0
    %1629 = vmatpush.msra.mxu0 0.0
    %1630 = vmatpush.msra.mxu0 %v1608
    %1631 = vmatpush.msra.mxu0 %v1607
    %1632 = vmatpush.msra.mxu0 %v1606
    %1633 = vmatpush.msra.mxu0 %v1605
    %1634 = vmatmul.f32.gmra.mxu0 %v1033
    %v1635 = vpop.f32.mrf.mxu0
    %v1636 = vadd.f32 %v1616, %v1635
    %1637 = vdwg.mxu0
    %v1638 = vtanh.pop %v1636
    %v1640 = vperm.slane %v1614, 0
    %v1643 = vsel %vm224, %v1638, 0
    %1645 = vmatpush.msra.mxu0 0.0
    %1646 = vmatpush.msra.mxu0 0.0
    %1647 = vmatpush.msra.mxu0 0.0
    %1648 = vmatpush.msra.mxu0 0.0
    %1649 = vmatpush.msra.mxu0 0.0
    %1650 = vmatpush.msra.mxu0 0.0
    %1651 = vmatpush.msra.mxu0 0.0
    %1652 = vmatpush.msra.mxu0 0.0
    %1653 = vmatpush.msra.mxu0 0.0
    %1654 = vmatpush.msra.mxu0 0.0
    %1655 = vmatpush.msra.mxu0 0.0
    %1656 = vmatpush.msra.mxu0 0.0
    %1657 = vmatpush.msra.mxu0 %v1613
    %1658 = vmatpush.msra.mxu0 %v1612
    %1659 = vmatpush.msra.mxu0 %v1611
    %1660 = vmatpush.msra.mxu0 %v1610
    %1661 = vmatmul.f32.gmra.mxu0 %v1643
    %v1662 = vpop.f32.mrf.mxu0
    %v1663 = vadd.f32 %v1640, %v1662
    %1664 = vdwg.mxu0
    %1665 = vst [vmem:[#allocation17] sm:$0xff] %v1663
    %1666 = vmatpush.msra.mxu0 0.0
    %1667 = vmatpush.msra.mxu0 0.0
    %1668 = vmatpush.msra.mxu0 0.0
    %1669 = vmatpush.msra.mxu0 0.0
    %1670 = vmatpush.msra.mxu0 0.0
    %1671 = vmatpush.msra.mxu0 0.0
    %1672 = vmatpush.msra.mxu0 0.0
    %1673 = vmatpush.msra.mxu0 0.0
    %1674 = vmatpush.msra.mxu0 0.0
    %1675 = vmatpush.msra.mxu0 0.0
    %1676 = vmatpush.msra.mxu0 0.0
    %1677 = vmatpush.msra.mxu0 0.0
    %1678 = vmatpush.msra.mxu0 %v1608
    %1679 = vmatpush.msra.mxu0 %v1607
    %1680 = vmatpush.msra.mxu0 %v1606
    %1681 = vmatpush.msra.mxu0 %v1605
    %1682 = vmatmul.f32.gmra.mxu0 %v1116
    %v1683 = vpop.f32.mrf.mxu0
    %v1684 = vadd.f32 %v1616, %v1683
    %1685 = vdwg.mxu0
    %v1686 = vtanh.pop %v1684
    %v1688 = vsel %vm224, %v1686, 0
    %1690 = vmatpush.msra.mxu0 0.0
    %1691 = vmatpush.msra.mxu0 0.0
    %1692 = vmatpush.msra.mxu0 0.0
    %1693 = vmatpush.msra.mxu0 0.0
    %1694 = vmatpush.msra.mxu0 0.0
    %1695 = vmatpush.msra.mxu0 0.0
    %1696 = vmatpush.msra.mxu0 0.0
    %1697 = vmatpush.msra.mxu0 0.0
    %1698 = vmatpush.msra.mxu0 0.0
    %1699 = vmatpush.msra.mxu0 0.0
    %1700 = vmatpush.msra.mxu0 0.0
    %1701 = vmatpush.msra.mxu0 0.0
    %1702 = vmatpush.msra.mxu0 %v1613
    %1703 = vmatpush.msra.mxu0 %v1612
    %1704 = vmatpush.msra.mxu0 %v1611
    %1705 = vmatpush.msra.mxu0 %v1610
    %1706 = vmatmul.f32.gmra.mxu0 %v1688
    %v1707 = vpop.f32.mrf.mxu0
    %v1708 = vadd.f32 %v1640, %v1707
    %1709 = vdwg.mxu0
    %1710 = vst [vmem:[#allocation17 + $0x8] sm:$0xff] %v1708
    %1711 = vmatpush.msra.mxu0 0.0
    %1712 = vmatpush.msra.mxu0 0.0
    %1713 = vmatpush.msra.mxu0 0.0
    %1714 = vmatpush.msra.mxu0 0.0
    %1715 = vmatpush.msra.mxu0 0.0
    %1716 = vmatpush.msra.mxu0 0.0
    %1717 = vmatpush.msra.mxu0 0.0
    %1718 = vmatpush.msra.mxu0 0.0
    %1719 = vmatpush.msra.mxu0 0.0
    %1720 = vmatpush.msra.mxu0 0.0
    %1721 = vmatpush.msra.mxu0 0.0
    %1722 = vmatpush.msra.mxu0 0.0
    %1723 = vmatpush.msra.mxu0 %v1608
    %1724 = vmatpush.msra.mxu0 %v1607
    %1725 = vmatpush.msra.mxu0 %v1606
    %1726 = vmatpush.msra.mxu0 %v1605
    %1727 = vmatmul.f32.gmra.mxu0 %v1199
    %v1728 = vpop.f32.mrf.mxu0
    %v1729 = vadd.f32 %v1616, %v1728
    %1730 = vdwg.mxu0
    %v1731 = vtanh.pop %v1729
    %v1733 = vsel %vm224, %v1731, 0
    %1735 = vmatpush.msra.mxu0 0.0
    %1736 = vmatpush.msra.mxu0 0.0
    %1737 = vmatpush.msra.mxu0 0.0
    %1738 = vmatpush.msra.mxu0 0.0
    %1739 = vmatpush.msra.mxu0 0.0
    %1740 = vmatpush.msra.mxu0 0.0
    %1741 = vmatpush.msra.mxu0 0.0
    %1742 = vmatpush.msra.mxu0 0.0
    %1743 = vmatpush.msra.mxu0 0.0
    %1744 = vmatpush.msra.mxu0 0.0
    %1745 = vmatpush.msra.mxu0 0.0
    %1746 = vmatpush.msra.mxu0 0.0
    %1747 = vmatpush.msra.mxu0 %v1613
    %1748 = vmatpush.msra.mxu0 %v1612
    %1749 = vmatpush.msra.mxu0 %v1611
    %1750 = vmatpush.msra.mxu0 %v1610
    %1751 = vmatmul.f32.gmra.mxu0 %v1733
    %v1752 = vpop.f32.mrf.mxu0
    %v1753 = vadd.f32 %v1640, %v1752
    %1754 = vdwg.mxu0
    %1755 = vst [vmem:[#allocation17 + $0x10] sm:$0xff] %v1753
    %1756 = vmatpush.msra.mxu0 0.0
    %1757 = vmatpush.msra.mxu0 0.0
    %1758 = vmatpush.msra.mxu0 0.0
    %1759 = vmatpush.msra.mxu0 0.0
    %1760 = vmatpush.msra.mxu0 0.0
    %1761 = vmatpush.msra.mxu0 0.0
    %1762 = vmatpush.msra.mxu0 0.0
    %1763 = vmatpush.msra.mxu0 0.0
    %1764 = vmatpush.msra.mxu0 0.0
    %1765 = vmatpush.msra.mxu0 0.0
    %1766 = vmatpush.msra.mxu0 0.0
    %1767 = vmatpush.msra.mxu0 0.0
    %1768 = vmatpush.msra.mxu0 %v1608
    %1769 = vmatpush.msra.mxu0 %v1607
    %1770 = vmatpush.msra.mxu0 %v1606
    %1771 = vmatpush.msra.mxu0 %v1605
    %1772 = vmatmul.f32.gmra.mxu0 %v1282
    %v1773 = vpop.f32.mrf.mxu0
    %v1774 = vadd.f32 %v1616, %v1773
    %1775 = vdwg.mxu0
    %v1776 = vtanh.pop %v1774
    %v1778 = vsel %vm224, %v1776, 0
    %1780 = vmatpush.msra.mxu0 0.0
    %1781 = vmatpush.msra.mxu0 0.0
    %1782 = vmatpush.msra.mxu0 0.0
    %1783 = vmatpush.msra.mxu0 0.0
    %1784 = vmatpush.msra.mxu0 0.0
    %1785 = vmatpush.msra.mxu0 0.0
    %1786 = vmatpush.msra.mxu0 0.0
    %1787 = vmatpush.msra.mxu0 0.0
    %1788 = vmatpush.msra.mxu0 0.0
    %1789 = vmatpush.msra.mxu0 0.0
    %1790 = vmatpush.msra.mxu0 0.0
    %1791 = vmatpush.msra.mxu0 0.0
    %1792 = vmatpush.msra.mxu0 %v1613
    %1793 = vmatpush.msra.mxu0 %v1612
    %1794 = vmatpush.msra.mxu0 %v1611
    %1795 = vmatpush.msra.mxu0 %v1610
    %1796 = vmatmul.f32.gmra.mxu0 %v1778
    %v1797 = vpop.f32.mrf.mxu0
    %v1798 = vadd.f32 %v1640, %v1797
    %1799 = vdwg.mxu0
    %1800 = vst [vmem:[#allocation17 + $0x18] sm:$0xff] %v1798
    %1801 = vmatpush.msra.mxu0 0.0
    %1802 = vmatpush.msra.mxu0 0.0
    %1803 = vmatpush.msra.mxu0 0.0
    %1804 = vmatpush.msra.mxu0 0.0
    %1805 = vmatpush.msra.mxu0 0.0
    %1806 = vmatpush.msra.mxu0 0.0
    %1807 = vmatpush.msra.mxu0 0.0
    %1808 = vmatpush.msra.mxu0 0.0
    %1809 = vmatpush.msra.mxu0 0.0
    %1810 = vmatpush.msra.mxu0 0.0
    %1811 = vmatpush.msra.mxu0 0.0
    %1812 = vmatpush.msra.mxu0 0.0
    %1813 = vmatpush.msra.mxu0 %v1608
    %1814 = vmatpush.msra.mxu0 %v1607
    %1815 = vmatpush.msra.mxu0 %v1606
    %1816 = vmatpush.msra.mxu0 %v1605
    %1817 = vmatmul.f32.gmra.mxu0 %v1365
    %v1818 = vpop.f32.mrf.mxu0
    %v1819 = vadd.f32 %v1616, %v1818
    %1820 = vdwg.mxu0
    %v1821 = vtanh.pop %v1819
    %v1823 = vsel %vm224, %v1821, 0
    %1825 = vmatpush.msra.mxu0 0.0
    %1826 = vmatpush.msra.mxu0 0.0
    %1827 = vmatpush.msra.mxu0 0.0
    %1828 = vmatpush.msra.mxu0 0.0
    %1829 = vmatpush.msra.mxu0 0.0
    %1830 = vmatpush.msra.mxu0 0.0
    %1831 = vmatpush.msra.mxu0 0.0
    %1832 = vmatpush.msra.mxu0 0.0
    %1833 = vmatpush.msra.mxu0 0.0
    %1834 = vmatpush.msra.mxu0 0.0
    %1835 = vmatpush.msra.mxu0 0.0
    %1836 = vmatpush.msra.mxu0 0.0
    %1837 = vmatpush.msra.mxu0 %v1613
    %1838 = vmatpush.msra.mxu0 %v1612
    %1839 = vmatpush.msra.mxu0 %v1611
    %1840 = vmatpush.msra.mxu0 %v1610
    %1841 = vmatmul.f32.gmra.mxu0 %v1823
    %v1842 = vpop.f32.mrf.mxu0
    %v1843 = vadd.f32 %v1640, %v1842
    %1844 = vdwg.mxu0
    %1845 = vst [vmem:[#allocation17 + $0x20] sm:$0xff] %v1843
    %1846 = vmatpush.msra.mxu0 0.0
    %1847 = vmatpush.msra.mxu0 0.0
    %1848 = vmatpush.msra.mxu0 0.0
    %1849 = vmatpush.msra.mxu0 0.0
    %1850 = vmatpush.msra.mxu0 0.0
    %1851 = vmatpush.msra.mxu0 0.0
    %1852 = vmatpush.msra.mxu0 0.0
    %1853 = vmatpush.msra.mxu0 0.0
    %1854 = vmatpush.msra.mxu0 0.0
    %1855 = vmatpush.msra.mxu0 0.0
    %1856 = vmatpush.msra.mxu0 0.0
    %1857 = vmatpush.msra.mxu0 0.0
    %1858 = vmatpush.msra.mxu0 %v1608
    %1859 = vmatpush.msra.mxu0 %v1607
    %1860 = vmatpush.msra.mxu0 %v1606
    %1861 = vmatpush.msra.mxu0 %v1605
    %1862 = vmatmul.f32.gmra.mxu0 %v1448
    %v1863 = vpop.f32.mrf.mxu0
    %v1864 = vadd.f32 %v1616, %v1863
    %1865 = vdwg.mxu0
    %v1866 = vtanh.pop %v1864
    %v1868 = vsel %vm224, %v1866, 0
    %1870 = vmatpush.msra.mxu0 0.0
    %1871 = vmatpush.msra.mxu0 0.0
    %1872 = vmatpush.msra.mxu0 0.0
    %1873 = vmatpush.msra.mxu0 0.0
    %1874 = vmatpush.msra.mxu0 0.0
    %1875 = vmatpush.msra.mxu0 0.0
    %1876 = vmatpush.msra.mxu0 0.0
    %1877 = vmatpush.msra.mxu0 0.0
    %1878 = vmatpush.msra.mxu0 0.0
    %1879 = vmatpush.msra.mxu0 0.0
    %1880 = vmatpush.msra.mxu0 0.0
    %1881 = vmatpush.msra.mxu0 0.0
    %1882 = vmatpush.msra.mxu0 %v1613
    %1883 = vmatpush.msra.mxu0 %v1612
    %1884 = vmatpush.msra.mxu0 %v1611
    %1885 = vmatpush.msra.mxu0 %v1610
    %1886 = vmatmul.f32.gmra.mxu0 %v1868
    %v1887 = vpop.f32.mrf.mxu0
    %v1888 = vadd.f32 %v1640, %v1887
    %1889 = vdwg.mxu0
    %1890 = vst [vmem:[#allocation17 + $0x28] sm:$0xff] %v1888
    %1891 = vmatpush.msra.mxu0 0.0
    %1892 = vmatpush.msra.mxu0 0.0
    %1893 = vmatpush.msra.mxu0 0.0
    %1894 = vmatpush.msra.mxu0 0.0
    %1895 = vmatpush.msra.mxu0 0.0
    %1896 = vmatpush.msra.mxu0 0.0
    %1897 = vmatpush.msra.mxu0 0.0
    %1898 = vmatpush.msra.mxu0 0.0
    %1899 = vmatpush.msra.mxu0 0.0
    %1900 = vmatpush.msra.mxu0 0.0
    %1901 = vmatpush.msra.mxu0 0.0
    %1902 = vmatpush.msra.mxu0 0.0
    %1903 = vmatpush.msra.mxu0 %v1608
    %1904 = vmatpush.msra.mxu0 %v1607
    %1905 = vmatpush.msra.mxu0 %v1606
    %1906 = vmatpush.msra.mxu0 %v1605
    %1907 = vmatmul.f32.gmra.mxu0 %v1533
    %v1908 = vpop.f32.mrf.mxu0
    %v1909 = vadd.f32 %v1616, %v1908
    %1910 = vdwg.mxu0
    %v1911 = vtanh.pop %v1909
    %v1913 = vsel %vm224, %v1911, 0
    %1915 = vmatpush.msra.mxu0 0.0
    %1916 = vmatpush.msra.mxu0 0.0
    %1917 = vmatpush.msra.mxu0 0.0
    %1918 = vmatpush.msra.mxu0 0.0
    %1919 = vmatpush.msra.mxu0 0.0
    %1920 = vmatpush.msra.mxu0 0.0
    %1921 = vmatpush.msra.mxu0 0.0
    %1922 = vmatpush.msra.mxu0 0.0
    %1923 = vmatpush.msra.mxu0 0.0
    %1924 = vmatpush.msra.mxu0 0.0
    %1925 = vmatpush.msra.mxu0 0.0
    %1926 = vmatpush.msra.mxu0 0.0
    %1927 = vmatpush.msra.mxu0 %v1613
    %1928 = vmatpush.msra.mxu0 %v1612
    %1929 = vmatpush.msra.mxu0 %v1611
    %1930 = vmatpush.msra.mxu0 %v1610
    %1931 = vmatmul.f32.gmra.mxu0 %v1913
    %v1932 = vpop.f32.mrf.mxu0
    %v1933 = vadd.f32 %v1640, %v1932
    %1934 = vdwg.mxu0
    %1935 = vst [vmem:[#allocation17 + $0x30] sm:$0xff] %v1933
    %v1936 = vsel %vm224, %v1595, 0
    %1938 = vmatpush.msra.mxu0 0.0
    %1939 = vmatpush.msra.mxu0 0.0
    %1940 = vmatpush.msra.mxu0 0.0
    %1941 = vmatpush.msra.mxu0 0.0
    %1942 = vmatpush.msra.mxu0 0.0
    %1943 = vmatpush.msra.mxu0 0.0
    %1944 = vmatpush.msra.mxu0 0.0
    %1945 = vmatpush.msra.mxu0 0.0
    %1946 = vmatpush.msra.mxu0 0.0
    %1947 = vmatpush.msra.mxu0 0.0
    %1948 = vmatpush.msra.mxu0 0.0
    %1949 = vmatpush.msra.mxu0 0.0
    %1950 = vmatpush.msra.mxu0 %v1608
    %1951 = vmatpush.msra.mxu0 %v1607
    %1952 = vmatpush.msra.mxu0 %v1606
    %1953 = vmatpush.msra.mxu0 %v1605
    %1954 = vmatmul.f32.gmra.mxu0 %v1936
    %v1955 = vpop.f32.mrf.mxu0
    %v1956 = vadd.f32 %v1616, %v1955
    %1957 = vdwg.mxu0
    %v1958 = vtanh.pop %v1956
    %v1960 = vsel %vm224, %v1958, 0
    %1962 = vmatpush.msra.mxu0 0.0
    %1963 = vmatpush.msra.mxu0 0.0
    %1964 = vmatpush.msra.mxu0 0.0
    %1965 = vmatpush.msra.mxu0 0.0
    %1966 = vmatpush.msra.mxu0 0.0
    %1967 = vmatpush.msra.mxu0 0.0
    %1968 = vmatpush.msra.mxu0 0.0
    %1969 = vmatpush.msra.mxu0 0.0
    %1970 = vmatpush.msra.mxu0 0.0
    %1971 = vmatpush.msra.mxu0 0.0
    %1972 = vmatpush.msra.mxu0 0.0
    %1973 = vmatpush.msra.mxu0 0.0
    %1974 = vmatpush.msra.mxu0 %v1613
    %1975 = vmatpush.msra.mxu0 %v1612
    %1976 = vmatpush.msra.mxu0 %v1611
    %1977 = vmatpush.msra.mxu0 %v1610
    %1978 = vmatmul.f32.gmra.mxu0 %v1960
    %v1979 = vpop.f32.mrf.mxu0
    %v1980 = vadd.f32 %v1640, %v1979
    %1981 = vdwg.mxu0
    %1982 = vst [vmem:[#allocation17 + $0x38] sm:$0xff] %v1980
    // Predicated region
    $region90: #{tpu_custom_call.1} parent=1 // pred_check
      _
    $region91: #{tpu_custom_call.1} parent=1 // pred_check_branch
      %1984 = sbr.rel (0) target = $region93
    $region92: #{tpu_custom_call.1} parent=1 // pred_region
      %1986 = vsyncadd [#allocation4], 0
      %s1988 = sshll.u32 [#allocation17], 4
      %s1989 = int_to_ptr.vmem [resolvable:$true] %s1988
      %s1990 = sshll.u32 %s13, 4
      %s1991 = int_to_ptr.hbm [resolvable:$true] %s1990
      %1993 = dma.vmem_to_hbm [thread:$0]  %s1989, 1024, %s1991, [#allocation4]
    $region93: #{tpu_custom_call.1} parent=1 // pred_fallthru
      _
    // Predicated region
    $region94: #{tpu_custom_call.1} parent=1 // pred_check
      _
    $region95: #{tpu_custom_call.1} parent=1 // pred_check_branch
      %1995 = sbr.rel (0) target = $region97
    $region96: #{tpu_custom_call.1} parent=1 // pred_region
      %1997 = vsyncadd [#allocation19], 0
      %s1998 = sshll.u32 [#allocation18], 4
      %s1999 = int_to_ptr.vmem [resolvable:$true] %s1998
      %s2000 = sshll.u32 %s14, 4
      %s2001 = int_to_ptr.hbm [resolvable:$true] %s2000
      %2006 = dma.vmem_to_hbm [thread:$0]  %s1999, 256, %s2001, [#allocation19], 128, 128, 8
    $region97: #{tpu_custom_call.1} parent=1 // pred_fallthru
      _
    // Predicated region
    $region98: #{tpu_custom_call.1} parent=1 // pred_check
      _
    $region99: #{tpu_custom_call.1} parent=1 // pred_check_branch
      %2008 = sbr.rel (0) target = $region101
    $region100: #{tpu_custom_call.1} parent=1 // pred_region
      %2010 = vsyncadd [#allocation19], 0
      %s2011 = sshll.u32 [#allocation20], 4
      %s2012 = int_to_ptr.vmem [resolvable:$true] %s2011
      %s2013 = sshll.u32 %s15, 4
      %s2014 = int_to_ptr.hbm [resolvable:$true] %s2013
      %2019 = dma.vmem_to_hbm [thread:$0]  %s2012, 256, %s2014, [#allocation19], 128, 128, 8
    $region101: #{tpu_custom_call.1} parent=1 // pred_fallthru
      _
    // Predicated region
    $region102: #{tpu_custom_call.1} parent=1 // pred_check
      _
    $region103: #{tpu_custom_call.1} parent=1 // pred_check_branch
      %2021 = sbr.rel (0) target = $region105
    $region104: #{tpu_custom_call.1} parent=1 // pred_region
      %2023 = dma.done [#allocation4], 1024
    $region105: #{tpu_custom_call.1} parent=1 // pred_fallthru
      _
    // Predicated region
    $region106: #{tpu_custom_call.1} parent=1 // pred_check
      _
    $region107: #{tpu_custom_call.1} parent=1 // pred_check_branch
      %2025 = sbr.rel (0) target = $region109
    $region108: #{tpu_custom_call.1} parent=1 // pred_region
      %2027 = dma.done [#allocation19], 256
    $region109: #{tpu_custom_call.1} parent=1 // pred_fallthru
      _
    // Predicated region
    $region110: #{tpu_custom_call.1} parent=1 // pred_check
      _
    $region111: #{tpu_custom_call.1} parent=1 // pred_check_branch
      %2029 = sbr.rel (0) target = $region113
    $region112: #{tpu_custom_call.1} parent=1 // pred_region
      %2031 = dma.done [#allocation19], 256
    $region113: #{tpu_custom_call.1} parent=1 // pred_fallthru
      _
    %2032 = vsyncpa [#allocation3], 1
    %2033 = vsyncpa [#allocation6], 1
    %2034 = vsyncpa [#allocation9], 1
    %2035 = vsyncpa [#allocation12], 1
    %2036 = vsyncpa [#allocation15], 1
    %2037 = vsyncpa [#allocation4], 1
    %2038 = vsyncpa [#allocation19], 1

</llo_original>
